<compile_context>
chip_gen: v5e
topology: v5e:2x2
jax: 0.10.0
libtpu: 0.0.40
codegen_flags: <defaults>
</compile_context>

<pallas_src>
import numpy as np
import jax
import jax.numpy as jnp
from jax.experimental import pallas as pl
from jax.experimental.pallas import tpu as pltpu


def _round_up(v, m):
    return (v + m - 1) // m * m


def _pick_tile_wh(B, Wh, Ww, row_target):
    """Largest divisor of Wh with rows = tile_wh*Ww a multiple of 8 and <= target."""
    divs = [d for d in range(Wh, 0, -1) if Wh % d == 0]          # descending
    cands = [d for d in divs if (d * Ww) % 8 == 0]
    if not cands:
        # rows == Wh*Ww equals the full output dim -> always a legal block shape
        return Wh
    fitting = [d for d in cands if d * Ww <= row_target]
    tile_wh = fitting[0] if fitting else cands[-1]
    # keep the grid length >= 2 so both v7x TensorCores get work when possible
    if B * (Wh // tile_wh) < 2:
        smaller = [d for d in cands if d < tile_wh]
        if smaller:
            tile_wh = smaller[0]
    return tile_wh


def _make_kernel(C, ph, pw, Ww, tile_wh, E_true, eps, with_norm, bf16_matmul):
    inv_e = 1.0 / float(E_true)

    def kernel(x_ref, w_ref, p_ref, o_ref, lhs_ref):
        # x_ref : (1, C, tile_wh, ph, Ww, pw)   streamed image tile
        # w_ref : (K, Ep)                        resident projection weight
        # p_ref : (8, Ep)                        row0=bias, row1=gamma, row2=beta
        # o_ref : (1, rows, Ep)                  lane-dense output slab
        # lhs_ref: VMEM (rows, K) f32 scratch    fused-patchify staging buffer

        # ---- fused patchify: scatter (Ww, pw) slabs into the (rows, K) LHS ----
        # Uses only static-offset slices/stores (robust lowering); the shuffle
        # work lands on the load/store + XLU slots, which are otherwise idle in
        # this HBM-bound kernel.
        for t in range(tile_wh):
            r0 = t * Ww
            for c in range(C):
                for y in range(ph):
                    col = (c * ph + y) * pw
                    lhs_ref[r0:r0 + Ww, col:col + pw] = x_ref[0, c, t, y, :, :]

        lhs = lhs_ref[...]
        if bf16_matmul:
            lhs = lhs.astype(jnp.bfloat16)       # MXU operands bf16, accumulate f32

        # ---- projection on the MXU (+ bias), f32 ----
        y = jnp.dot(lhs, w_ref[...], preferred_element_type=jnp.float32)
        y = y + p_ref[0:1, :]                    # padded bias columns are exact 0

        if with_norm:
            # LayerNorm over the TRUE embed_dim; padded columns contribute 0 to
            # both sums, so dividing by E_true gives the correct statistics.
            mu = jnp.sum(y, axis=-1, keepdims=True) * inv_e
            ex2 = jnp.sum(y * y, axis=-1, keepdims=True) * inv_e
            y = (y - mu) * jax.lax.rsqrt(ex2 - mu * mu + eps)
            y = y * p_ref[1:2, :] + p_ref[2:3, :]   # padded gamma/beta are 0

        o_ref[0] = y.astype(o_ref.dtype)

    return kernel


def patch_embed_pallas(x, conv_w, conv_b, patch_size, norm_params=None,
                       eps=1e-5, use_bf16_matmul=True, row_target=1024):
    """x: (B, C, H, W); conv_w: (E, C, ph, pw); conv_b: (E,).

    Returns (y, Wh, Ww) with y: (B, Wh*Ww, E), matching
    `self.proj(x).flatten(2).transpose(1, 2)` (+ optional LayerNorm).
    """
    B, C, H, W = x.shape
    ph, pw = patch_size
    Wh, Ww = H // ph, W // pw
    E = conv_w.shape[0]
    K = C * ph * pw
    Ep = _round_up(E, 128)                       # lane-dense (unmasked) stores

    tile_wh = _pick_tile_wh(B, Wh, Ww, row_target)
    n_wh = Wh // tile_wh
    rows = tile_wh * Ww

    # Free reshape (no data movement): exposes the patch structure to the BlockSpec.
    x6 = x.reshape(B, C, Wh, ph, Ww, pw)

    # Projection weight: (E, C, ph, pw) -> (K, Ep) with zero-padded columns (tiny).
    w_dtype = jnp.bfloat16 if use_bf16_matmul else x.dtype
    w_kE = conv_w.reshape(E, K).T
    w_pad = jnp.zeros((K, Ep), w_dtype).at[:, :E].set(w_kE.astype(w_dtype))

    # bias / gamma / beta merged into a single small resident array.
    with_norm = norm_params is not None
    params = jnp.zeros((8, Ep), jnp.float32)
    params = params.at[0, :E].set(conv_b.astype(jnp.float32))
    if with_norm:
        gamma, beta = norm_params
        params = params.at[1, :E].set(gamma.astype(jnp.float32))
        params = params.at[2, :E].set(beta.astype(jnp.float32))

    kernel = _make_kernel(C, ph, pw, Ww, tile_wh, E, eps, with_norm, use_bf16_matmul)

    # VMEM budget with padded layouts + double buffering; raise the scoped limit
    # only when the per-chip default (16 MiB v5e / 32 MiB v6e,v7x) would be tight.
    xblk = C * tile_wh * ph * _round_up(Ww, 8) * _round_up(pw, 128) * 4
    oblk = rows * Ep * 4
    wbytes = _round_up(K, 8) * Ep * (2 if use_bf16_matmul else 4)
    scratch = rows * _round_up(K, 128) * 4
    est = 2 * (xblk + oblk) + wbytes + 8 * Ep * 4 + scratch
    vmem_limit = int(min(1.5 * est, 56 * 2**20)) if est > 12 * 2**20 else None

    out = pl.pallas_call(
        kernel,
        out_shape=jax.ShapeDtypeStruct((B, Wh * Ww, Ep), x.dtype),
        grid=(B, n_wh),
        in_specs=[
            pl.BlockSpec((1, C, tile_wh, ph, Ww, pw),
                         lambda b, i: (b, 0, i, 0, 0, 0)),      # streamed image tile
            pl.BlockSpec((K, Ep), lambda b, i: (0, 0)),          # resident weight
            pl.BlockSpec((8, Ep), lambda b, i: (0, 0)),          # resident bias/ln params
        ],
        out_specs=pl.BlockSpec((1, rows, Ep), lambda b, i: (b, i, 0)),
        scratch_shapes=[pltpu.VMEM((rows, K), jnp.float32)],
        compiler_params=pltpu.CompilerParams(
            dimension_semantics=("parallel", "parallel"),
            vmem_limit_bytes=vmem_limit),
    )(x6, w_pad, params)

    if Ep != E:
        out = out[:, :, :E]                       # strip lane padding
    # TODO(synk): ape=True path (absolute_pos_embed + bicubic F.interpolate resize)
    # is not implemented; the module default ape=False is what this covers.
    return out, Wh, Ww


# --------------------------------------------------------------------------
# Pure-JAX reference (mirrors the PyTorch forward: Conv2d + flatten/transpose + LN)
# --------------------------------------------------------------------------
def reference(x, conv_w, conv_b, patch_size, norm_params=None, eps=1e-5):
    y = jax.lax.conv_general_dilated(
        x, conv_w, window_strides=patch_size, padding="VALID",
        dimension_numbers=("NCHW", "OIHW", "NCHW"))
    y = y + conv_b[None, :, None, None]
    B, E, Wh, Ww = y.shape
    y = y.reshape(B, E, Wh * Ww).transpose(0, 2, 1)              # (B, Wh*Ww, E)
    if norm_params is not None:
        gamma, beta = norm_params
        mu = jnp.mean(y, axis=-1, keepdims=True)
        var = jnp.mean((y - mu) ** 2, axis=-1, keepdims=True)
        y = (y - mu) / jnp.sqrt(var + eps) * gamma + beta
    return y, Wh, Ww


if __name__ == "__main__":
    # Small config: B=2, in_chans=3, img 32x32, patch 4x4 -> Wh=Ww=8, embed_dim=32
    B, C, Himg, Wimg = 2, 3, 32, 32
    patch_size = (4, 4)
    embed_dim = 32

    key = jax.random.PRNGKey(0)
    k0, k1, k2, k3, k4 = jax.random.split(key, 5)
    x = jax.random.normal(k0, (B, C, Himg, Wimg), jnp.float32)
    conv_w = 0.05 * jax.random.normal(k1, (embed_dim, C, patch_size[0], patch_size[1]), jnp.float32)
    conv_b = 0.02 * jax.random.normal(k2, (embed_dim,), jnp.float32)
    gamma = 1.0 + 0.1 * jax.random.normal(k3, (embed_dim,), jnp.float32)
    beta = 0.1 * jax.random.normal(k4, (embed_dim,), jnp.float32)
    norm_params = (gamma, beta)

    ref_ln, Wh_r, Ww_r = reference(x, conv_w, conv_b, patch_size, norm_params)
    ref_raw, _, _ = reference(x, conv_w, conv_b, patch_size, None)

    # 1) f32 MXU operands + LayerNorm: tight check against the conv reference.
    out, Wh, Ww = patch_embed_pallas(x, conv_w, conv_b, patch_size, norm_params,
                                     use_bf16_matmul=False)
    out = jax.block_until_ready(out)
    assert (Wh, Ww) == (Wh_r, Ww_r)
    np.testing.assert_allclose(np.asarray(out), np.asarray(ref_ln), rtol=1e-3, atol=1e-3)

    # 2) bf16 MXU operands (v6e/v7x fast path), f32 accumulate + f32 LayerNorm.
    out_bf, _, _ = patch_embed_pallas(x, conv_w, conv_b, patch_size, norm_params,
                                      use_bf16_matmul=True)
    out_bf = jax.block_until_ready(out_bf)
    np.testing.assert_allclose(np.asarray(out_bf), np.asarray(ref_ln), rtol=3e-2, atol=3e-2)

    # 3) norm_layer=None variant of the module.
    out_nn, _, _ = patch_embed_pallas(x, conv_w, conv_b, patch_size, None,
                                      use_bf16_matmul=False)
    out_nn = jax.block_until_ready(out_nn)
    np.testing.assert_allclose(np.asarray(out_nn), np.asarray(ref_raw), rtol=1e-3, atol=1e-3)

    print("KERNEL_OK")
</pallas_src>

<mosaic_0001>
module attributes {stable_mosaic.version = 11 : i64} {
  func.func @kernel(%arg0: i32, %arg1: i32, %arg2: memref<1x3x8x4x8x4xf32, #tpu.memory_space<vmem>>, %arg3: memref<48x128xf32, #tpu.memory_space<vmem>>, %arg4: memref<8x128xf32, #tpu.memory_space<vmem>>, %arg5: memref<1x64x128xf32, #tpu.memory_space<vmem>>, %arg6: memref<64x48xf32, #tpu.memory_space<vmem>>) attributes {dimension_semantics = [#tpu.dimension_semantics<parallel>, #tpu.dimension_semantics<parallel>], iteration_bounds = array<i64: 2, 1>, scalar_prefetch = 0 : i64, scratch_operands = 1 : i64, tpu.core_type = #tpu.core_type<tc>, window_params = [{transform_indices = @transform_0, window_bounds = array<i64: 1, 3, 8, 4, 8, 4>}, {pipeline_mode = #tpu.pipeline_mode<synchronous>, transform_indices = @transform_1, window_bounds = array<i64: 48, 128>}, {pipeline_mode = #tpu.pipeline_mode<synchronous>, transform_indices = @transform_2, window_bounds = array<i64: 8, 128>}, {transform_indices = @transform_3, window_bounds = array<i64: 1, 64, 128>}]} {
    %c0 = arith.constant 0 : index
    %c0_0 = arith.constant 0 : index
    %c0_1 = arith.constant 0 : index
    %c0_2 = arith.constant 0 : index
    %c0_3 = arith.constant 0 : index
    %c0_4 = arith.constant 0 : index
    %0 = vector.load %arg2[%c0, %c0_0, %c0_1, %c0_2, %c0_3, %c0_4] : memref<1x3x8x4x8x4xf32, #tpu.memory_space<vmem>>, vector<1x1x1x1x8x4xf32>
    %1 = vector.shape_cast %0 : vector<1x1x1x1x8x4xf32> to vector<8x4xf32>
    %c0_5 = arith.constant 0 : index
    %c0_6 = arith.constant 0 : index
    %2 = vector.load %arg6[%c0_5, %c0_6] : memref<64x48xf32, #tpu.memory_space<vmem>>, vector<8x4xf32>
    tpu.vector_store %arg6[%c0_5, %c0_6], %1 {strides = array<i32>} : memref<64x48xf32, #tpu.memory_space<vmem>>, vector<8x4xf32>,
    %c0_7 = arith.constant 0 : index
    %c0_8 = arith.constant 0 : index
    %c0_9 = arith.constant 0 : index
    %c1 = arith.constant 1 : index
    %c0_10 = arith.constant 0 : index
    %c0_11 = arith.constant 0 : index
    %3 = vector.load %arg2[%c0_7, %c0_8, %c0_9, %c1, %c0_10, %c0_11] : memref<1x3x8x4x8x4xf32, #tpu.memory_space<vmem>>, vector<1x1x1x1x8x4xf32>
    %4 = vector.shape_cast %3 : vector<1x1x1x1x8x4xf32> to vector<8x4xf32>
    %c0_12 = arith.constant 0 : index
    %c4 = arith.constant 4 : index
    %5 = vector.load %arg6[%c0_12, %c4] : memref<64x48xf32, #tpu.memory_space<vmem>>, vector<8x4xf32>
    tpu.vector_store %arg6[%c0_12, %c4], %4 {strides = array<i32>} : memref<64x48xf32, #tpu.memory_space<vmem>>, vector<8x4xf32>,
    %c0_13 = arith.constant 0 : index
    %c0_14 = arith.constant 0 : index
    %c0_15 = arith.constant 0 : index
    %c2 = arith.constant 2 : index
    %c0_16 = arith.constant 0 : index
    %c0_17 = arith.constant 0 : index
    %6 = vector.load %arg2[%c0_13, %c0_14, %c0_15, %c2, %c0_16, %c0_17] : memref<1x3x8x4x8x4xf32, #tpu.memory_space<vmem>>, vector<1x1x1x1x8x4xf32>
    %7 = vector.shape_cast %6 : vector<1x1x1x1x8x4xf32> to vector<8x4xf32>
    %c0_18 = arith.constant 0 : index
    %c8 = arith.constant 8 : index
    %8 = vector.load %arg6[%c0_18, %c8] : memref<64x48xf32, #tpu.memory_space<vmem>>, vector<8x4xf32>
    tpu.vector_store %arg6[%c0_18, %c8], %7 {strides = array<i32>} : memref<64x48xf32, #tpu.memory_space<vmem>>, vector<8x4xf32>,
    %c0_19 = arith.constant 0 : index
    %c0_20 = arith.constant 0 : index
    %c0_21 = arith.constant 0 : index
    %c3 = arith.constant 3 : index
    %c0_22 = arith.constant 0 : index
    %c0_23 = arith.constant 0 : index
    %9 = vector.load %arg2[%c0_19, %c0_20, %c0_21, %c3, %c0_22, %c0_23] : memref<1x3x8x4x8x4xf32, #tpu.memory_space<vmem>>, vector<1x1x1x1x8x4xf32>
    %10 = vector.shape_cast %9 : vector<1x1x1x1x8x4xf32> to vector<8x4xf32>
    %c0_24 = arith.constant 0 : index
    %c12 = arith.constant 12 : index
    %11 = vector.load %arg6[%c0_24, %c12] : memref<64x48xf32, #tpu.memory_space<vmem>>, vector<8x4xf32>
    tpu.vector_store %arg6[%c0_24, %c12], %10 {strides = array<i32>} : memref<64x48xf32, #tpu.memory_space<vmem>>, vector<8x4xf32>,
    %c0_25 = arith.constant 0 : index
    %c1_26 = arith.constant 1 : index
    %c0_27 = arith.constant 0 : index
    %c0_28 = arith.constant 0 : index
    %c0_29 = arith.constant 0 : index
    %c0_30 = arith.constant 0 : index
    %12 = vector.load %arg2[%c0_25, %c1_26, %c0_27, %c0_28, %c0_29, %c0_30] : memref<1x3x8x4x8x4xf32, #tpu.memory_space<vmem>>, vector<1x1x1x1x8x4xf32>
    %13 = vector.shape_cast %12 : vector<1x1x1x1x8x4xf32> to vector<8x4xf32>
    %c0_31 = arith.constant 0 : index
    %c16 = arith.constant 16 : index
    %14 = vector.load %arg6[%c0_31, %c16] : memref<64x48xf32, #tpu.memory_space<vmem>>, vector<8x4xf32>
    tpu.vector_store %arg6[%c0_31, %c16], %13 {strides = array<i32>} : memref<64x48xf32, #tpu.memory_space<vmem>>, vector<8x4xf32>,
    %c0_32 = arith.constant 0 : index
    %c1_33 = arith.constant 1 : index
    %c0_34 = arith.constant 0 : index
    %c1_35 = arith.constant 1 : index
    %c0_36 = arith.constant 0 : index
    %c0_37 = arith.constant 0 : index
    %15 = vector.load %arg2[%c0_32, %c1_33, %c0_34, %c1_35, %c0_36, %c0_37] : memref<1x3x8x4x8x4xf32, #tpu.memory_space<vmem>>, vector<1x1x1x1x8x4xf32>
    %16 = vector.shape_cast %15 : vector<1x1x1x1x8x4xf32> to vector<8x4xf32>
    %c0_38 = arith.constant 0 : index
    %c20 = arith.constant 20 : index
    %17 = vector.load %arg6[%c0_38, %c20] : memref<64x48xf32, #tpu.memory_space<vmem>>, vector<8x4xf32>
    tpu.vector_store %arg6[%c0_38, %c20], %16 {strides = array<i32>} : memref<64x48xf32, #tpu.memory_space<vmem>>, vector<8x4xf32>,
    %c0_39 = arith.constant 0 : index
    %c1_40 = arith.constant 1 : index
    %c0_41 = arith.constant 0 : index
    %c2_42 = arith.constant 2 : index
    %c0_43 = arith.constant 0 : index
    %c0_44 = arith.constant 0 : index
    %18 = vector.load %arg2[%c0_39, %c1_40, %c0_41, %c2_42, %c0_43, %c0_44] : memref<1x3x8x4x8x4xf32, #tpu.memory_space<vmem>>, vector<1x1x1x1x8x4xf32>
    %19 = vector.shape_cast %18 : vector<1x1x1x1x8x4xf32> to vector<8x4xf32>
    %c0_45 = arith.constant 0 : index
    %c24 = arith.constant 24 : index
    %20 = vector.load %arg6[%c0_45, %c24] : memref<64x48xf32, #tpu.memory_space<vmem>>, vector<8x4xf32>
    tpu.vector_store %arg6[%c0_45, %c24], %19 {strides = array<i32>} : memref<64x48xf32, #tpu.memory_space<vmem>>, vector<8x4xf32>,
    %c0_46 = arith.constant 0 : index
    %c1_47 = arith.constant 1 : index
    %c0_48 = arith.constant 0 : index
    %c3_49 = arith.constant 3 : index
    %c0_50 = arith.constant 0 : index
    %c0_51 = arith.constant 0 : index
    %21 = vector.load %arg2[%c0_46, %c1_47, %c0_48, %c3_49, %c0_50, %c0_51] : memref<1x3x8x4x8x4xf32, #tpu.memory_space<vmem>>, vector<1x1x1x1x8x4xf32>
    %22 = vector.shape_cast %21 : vector<1x1x1x1x8x4xf32> to vector<8x4xf32>
    %c0_52 = arith.constant 0 : index
    %c28 = arith.constant 28 : index
    %23 = vector.load %arg6[%c0_52, %c28] : memref<64x48xf32, #tpu.memory_space<vmem>>, vector<8x4xf32>
    tpu.vector_store %arg6[%c0_52, %c28], %22 {strides = array<i32>} : memref<64x48xf32, #tpu.memory_space<vmem>>, vector<8x4xf32>,
    %c0_53 = arith.constant 0 : index
    %c2_54 = arith.constant 2 : index
    %c0_55 = arith.constant 0 : index
    %c0_56 = arith.constant 0 : index
    %c0_57 = arith.constant 0 : index
    %c0_58 = arith.constant 0 : index
    %24 = vector.load %arg2[%c0_53, %c2_54, %c0_55, %c0_56, %c0_57, %c0_58] : memref<1x3x8x4x8x4xf32, #tpu.memory_space<vmem>>, vector<1x1x1x1x8x4xf32>
    %25 = vector.shape_cast %24 : vector<1x1x1x1x8x4xf32> to vector<8x4xf32>
    %c0_59 = arith.constant 0 : index
    %c32 = arith.constant 32 : index
    %26 = vector.load %arg6[%c0_59, %c32] : memref<64x48xf32, #tpu.memory_space<vmem>>, vector<8x4xf32>
    tpu.vector_store %arg6[%c0_59, %c32], %25 {strides = array<i32>} : memref<64x48xf32, #tpu.memory_space<vmem>>, vector<8x4xf32>,
    %c0_60 = arith.constant 0 : index
    %c2_61 = arith.constant 2 : index
    %c0_62 = arith.constant 0 : index
    %c1_63 = arith.constant 1 : index
    %c0_64 = arith.constant 0 : index
    %c0_65 = arith.constant 0 : index
    %27 = vector.load %arg2[%c0_60, %c2_61, %c0_62, %c1_63, %c0_64, %c0_65] : memref<1x3x8x4x8x4xf32, #tpu.memory_space<vmem>>, vector<1x1x1x1x8x4xf32>
    %28 = vector.shape_cast %27 : vector<1x1x1x1x8x4xf32> to vector<8x4xf32>
    %c0_66 = arith.constant 0 : index
    %c36 = arith.constant 36 : index
    %29 = vector.load %arg6[%c0_66, %c36] : memref<64x48xf32, #tpu.memory_space<vmem>>, vector<8x4xf32>
    tpu.vector_store %arg6[%c0_66, %c36], %28 {strides = array<i32>} : memref<64x48xf32, #tpu.memory_space<vmem>>, vector<8x4xf32>,
    %c0_67 = arith.constant 0 : index
    %c2_68 = arith.constant 2 : index
    %c0_69 = arith.constant 0 : index
    %c2_70 = arith.constant 2 : index
    %c0_71 = arith.constant 0 : index
    %c0_72 = arith.constant 0 : index
    %30 = vector.load %arg2[%c0_67, %c2_68, %c0_69, %c2_70, %c0_71, %c0_72] : memref<1x3x8x4x8x4xf32, #tpu.memory_space<vmem>>, vector<1x1x1x1x8x4xf32>
    %31 = vector.shape_cast %30 : vector<1x1x1x1x8x4xf32> to vector<8x4xf32>
    %c0_73 = arith.constant 0 : index
    %c40 = arith.constant 40 : index
    %32 = vector.load %arg6[%c0_73, %c40] : memref<64x48xf32, #tpu.memory_space<vmem>>, vector<8x4xf32>
    tpu.vector_store %arg6[%c0_73, %c40], %31 {strides = array<i32>} : memref<64x48xf32, #tpu.memory_space<vmem>>, vector<8x4xf32>,
    %c0_74 = arith.constant 0 : index
    %c2_75 = arith.constant 2 : index
    %c0_76 = arith.constant 0 : index
    %c3_77 = arith.constant 3 : index
    %c0_78 = arith.constant 0 : index
    %c0_79 = arith.constant 0 : index
    %33 = vector.load %arg2[%c0_74, %c2_75, %c0_76, %c3_77, %c0_78, %c0_79] : memref<1x3x8x4x8x4xf32, #tpu.memory_space<vmem>>, vector<1x1x1x1x8x4xf32>
    %34 = vector.shape_cast %33 : vector<1x1x1x1x8x4xf32> to vector<8x4xf32>
    %c0_80 = arith.constant 0 : index
    %c44 = arith.constant 44 : index
    %35 = vector.load %arg6[%c0_80, %c44] : memref<64x48xf32, #tpu.memory_space<vmem>>, vector<8x4xf32>
    tpu.vector_store %arg6[%c0_80, %c44], %34 {strides = array<i32>} : memref<64x48xf32, #tpu.memory_space<vmem>>, vector<8x4xf32>,
    %c0_81 = arith.constant 0 : index
    %c0_82 = arith.constant 0 : index
    %c1_83 = arith.constant 1 : index
    %c0_84 = arith.constant 0 : index
    %c0_85 = arith.constant 0 : index
    %c0_86 = arith.constant 0 : index
    %36 = vector.load %arg2[%c0_81, %c0_82, %c1_83, %c0_84, %c0_85, %c0_86] : memref<1x3x8x4x8x4xf32, #tpu.memory_space<vmem>>, vector<1x1x1x1x8x4xf32>
    %37 = vector.shape_cast %36 : vector<1x1x1x1x8x4xf32> to vector<8x4xf32>
    %c8_87 = arith.constant 8 : index
    %c0_88 = arith.constant 0 : index
    %38 = vector.load %arg6[%c8_87, %c0_88] : memref<64x48xf32, #tpu.memory_space<vmem>>, vector<8x4xf32>
    tpu.vector_store %arg6[%c8_87, %c0_88], %37 {strides = array<i32>} : memref<64x48xf32, #tpu.memory_space<vmem>>, vector<8x4xf32>,
    %c0_89 = arith.constant 0 : index
    %c0_90 = arith.constant 0 : index
    %c1_91 = arith.constant 1 : index
    %c1_92 = arith.constant 1 : index
    %c0_93 = arith.constant 0 : index
    %c0_94 = arith.constant 0 : index
    %39 = vector.load %arg2[%c0_89, %c0_90, %c1_91, %c1_92, %c0_93, %c0_94] : memref<1x3x8x4x8x4xf32, #tpu.memory_space<vmem>>, vector<1x1x1x1x8x4xf32>
    %40 = vector.shape_cast %39 : vector<1x1x1x1x8x4xf32> to vector<8x4xf32>
    %c8_95 = arith.constant 8 : index
    %c4_96 = arith.constant 4 : index
    %41 = vector.load %arg6[%c8_95, %c4_96] : memref<64x48xf32, #tpu.memory_space<vmem>>, vector<8x4xf32>
    tpu.vector_store %arg6[%c8_95, %c4_96], %40 {strides = array<i32>} : memref<64x48xf32, #tpu.memory_space<vmem>>, vector<8x4xf32>,
    %c0_97 = arith.constant 0 : index
    %c0_98 = arith.constant 0 : index
    %c1_99 = arith.constant 1 : index
    %c2_100 = arith.constant 2 : index
    %c0_101 = arith.constant 0 : index
    %c0_102 = arith.constant 0 : index
    %42 = vector.load %arg2[%c0_97, %c0_98, %c1_99, %c2_100, %c0_101, %c0_102] : memref<1x3x8x4x8x4xf32, #tpu.memory_space<vmem>>, vector<1x1x1x1x8x4xf32>
    %43 = vector.shape_cast %42 : vector<1x1x1x1x8x4xf32> to vector<8x4xf32>
    %c8_103 = arith.constant 8 : index
    %c8_104 = arith.constant 8 : index
    %44 = vector.load %arg6[%c8_103, %c8_104] : memref<64x48xf32, #tpu.memory_space<vmem>>, vector<8x4xf32>
    tpu.vector_store %arg6[%c8_103, %c8_104], %43 {strides = array<i32>} : memref<64x48xf32, #tpu.memory_space<vmem>>, vector<8x4xf32>,
    %c0_105 = arith.constant 0 : index
    %c0_106 = arith.constant 0 : index
    %c1_107 = arith.constant 1 : index
    %c3_108 = arith.constant 3 : index
    %c0_109 = arith.constant 0 : index
    %c0_110 = arith.constant 0 : index
    %45 = vector.load %arg2[%c0_105, %c0_106, %c1_107, %c3_108, %c0_109, %c0_110] : memref<1x3x8x4x8x4xf32, #tpu.memory_space<vmem>>, vector<1x1x1x1x8x4xf32>
    %46 = vector.shape_cast %45 : vector<1x1x1x1x8x4xf32> to vector<8x4xf32>
    %c8_111 = arith.constant 8 : index
    %c12_112 = arith.constant 12 : index
    %47 = vector.load %arg6[%c8_111, %c12_112] : memref<64x48xf32, #tpu.memory_space<vmem>>, vector<8x4xf32>
    tpu.vector_store %arg6[%c8_111, %c12_112], %46 {strides = array<i32>} : memref<64x48xf32, #tpu.memory_space<vmem>>, vector<8x4xf32>,
    %c0_113 = arith.constant 0 : index
    %c1_114 = arith.constant 1 : index
    %c1_115 = arith.constant 1 : index
    %c0_116 = arith.constant 0 : index
    %c0_117 = arith.constant 0 : index
    %c0_118 = arith.constant 0 : index
    %48 = vector.load %arg2[%c0_113, %c1_114, %c1_115, %c0_116, %c0_117, %c0_118] : memref<1x3x8x4x8x4xf32, #tpu.memory_space<vmem>>, vector<1x1x1x1x8x4xf32>
    %49 = vector.shape_cast %48 : vector<1x1x1x1x8x4xf32> to vector<8x4xf32>
    %c8_119 = arith.constant 8 : index
    %c16_120 = arith.constant 16 : index
    %50 = vector.load %arg6[%c8_119, %c16_120] : memref<64x48xf32, #tpu.memory_space<vmem>>, vector<8x4xf32>
    tpu.vector_store %arg6[%c8_119, %c16_120], %49 {strides = array<i32>} : memref<64x48xf32, #tpu.memory_space<vmem>>, vector<8x4xf32>,
    %c0_121 = arith.constant 0 : index
    %c1_122 = arith.constant 1 : index
    %c1_123 = arith.constant 1 : index
    %c1_124 = arith.constant 1 : index
    %c0_125 = arith.constant 0 : index
    %c0_126 = arith.constant 0 : index
    %51 = vector.load %arg2[%c0_121, %c1_122, %c1_123, %c1_124, %c0_125, %c0_126] : memref<1x3x8x4x8x4xf32, #tpu.memory_space<vmem>>, vector<1x1x1x1x8x4xf32>
    %52 = vector.shape_cast %51 : vector<1x1x1x1x8x4xf32> to vector<8x4xf32>
    %c8_127 = arith.constant 8 : index
    %c20_128 = arith.constant 20 : index
    %53 = vector.load %arg6[%c8_127, %c20_128] : memref<64x48xf32, #tpu.memory_space<vmem>>, vector<8x4xf32>
    tpu.vector_store %arg6[%c8_127, %c20_128], %52 {strides = array<i32>} : memref<64x48xf32, #tpu.memory_space<vmem>>, vector<8x4xf32>,
    %c0_129 = arith.constant 0 : index
    %c1_130 = arith.constant 1 : index
    %c1_131 = arith.constant 1 : index
    %c2_132 = arith.constant 2 : index
    %c0_133 = arith.constant 0 : index
    %c0_134 = arith.constant 0 : index
    %54 = vector.load %arg2[%c0_129, %c1_130, %c1_131, %c2_132, %c0_133, %c0_134] : memref<1x3x8x4x8x4xf32, #tpu.memory_space<vmem>>, vector<1x1x1x1x8x4xf32>
    %55 = vector.shape_cast %54 : vector<1x1x1x1x8x4xf32> to vector<8x4xf32>
    %c8_135 = arith.constant 8 : index
    %c24_136 = arith.constant 24 : index
    %56 = vector.load %arg6[%c8_135, %c24_136] : memref<64x48xf32, #tpu.memory_space<vmem>>, vector<8x4xf32>
    tpu.vector_store %arg6[%c8_135, %c24_136], %55 {strides = array<i32>} : memref<64x48xf32, #tpu.memory_space<vmem>>, vector<8x4xf32>,
    %c0_137 = arith.constant 0 : index
    %c1_138 = arith.constant 1 : index
    %c1_139 = arith.constant 1 : index
    %c3_140 = arith.constant 3 : index
    %c0_141 = arith.constant 0 : index
    %c0_142 = arith.constant 0 : index
    %57 = vector.load %arg2[%c0_137, %c1_138, %c1_139, %c3_140, %c0_141, %c0_142] : memref<1x3x8x4x8x4xf32, #tpu.memory_space<vmem>>, vector<1x1x1x1x8x4xf32>
    %58 = vector.shape_cast %57 : vector<1x1x1x1x8x4xf32> to vector<8x4xf32>
    %c8_143 = arith.constant 8 : index
    %c28_144 = arith.constant 28 : index
    %59 = vector.load %arg6[%c8_143, %c28_144] : memref<64x48xf32, #tpu.memory_space<vmem>>, vector<8x4xf32>
    tpu.vector_store %arg6[%c8_143, %c28_144], %58 {strides = array<i32>} : memref<64x48xf32, #tpu.memory_space<vmem>>, vector<8x4xf32>,
    %c0_145 = arith.constant 0 : index
    %c2_146 = arith.constant 2 : index
    %c1_147 = arith.constant 1 : index
    %c0_148 = arith.constant 0 : index
    %c0_149 = arith.constant 0 : index
    %c0_150 = arith.constant 0 : index
    %60 = vector.load %arg2[%c0_145, %c2_146, %c1_147, %c0_148, %c0_149, %c0_150] : memref<1x3x8x4x8x4xf32, #tpu.memory_space<vmem>>, vector<1x1x1x1x8x4xf32>
    %61 = vector.shape_cast %60 : vector<1x1x1x1x8x4xf32> to vector<8x4xf32>
    %c8_151 = arith.constant 8 : index
    %c32_152 = arith.constant 32 : index
    %62 = vector.load %arg6[%c8_151, %c32_152] : memref<64x48xf32, #tpu.memory_space<vmem>>, vector<8x4xf32>
    tpu.vector_store %arg6[%c8_151, %c32_152], %61 {strides = array<i32>} : memref<64x48xf32, #tpu.memory_space<vmem>>, vector<8x4xf32>,
    %c0_153 = arith.constant 0 : index
    %c2_154 = arith.constant 2 : index
    %c1_155 = arith.constant 1 : index
    %c1_156 = arith.constant 1 : index
    %c0_157 = arith.constant 0 : index
    %c0_158 = arith.constant 0 : index
    %63 = vector.load %arg2[%c0_153, %c2_154, %c1_155, %c1_156, %c0_157, %c0_158] : memref<1x3x8x4x8x4xf32, #tpu.memory_space<vmem>>, vector<1x1x1x1x8x4xf32>
    %64 = vector.shape_cast %63 : vector<1x1x1x1x8x4xf32> to vector<8x4xf32>
    %c8_159 = arith.constant 8 : index
    %c36_160 = arith.constant 36 : index
    %65 = vector.load %arg6[%c8_159, %c36_160] : memref<64x48xf32, #tpu.memory_space<vmem>>, vector<8x4xf32>
    tpu.vector_store %arg6[%c8_159, %c36_160], %64 {strides = array<i32>} : memref<64x48xf32, #tpu.memory_space<vmem>>, vector<8x4xf32>,
    %c0_161 = arith.constant 0 : index
    %c2_162 = arith.constant 2 : index
    %c1_163 = arith.constant 1 : index
    %c2_164 = arith.constant 2 : index
    %c0_165 = arith.constant 0 : index
    %c0_166 = arith.constant 0 : index
    %66 = vector.load %arg2[%c0_161, %c2_162, %c1_163, %c2_164, %c0_165, %c0_166] : memref<1x3x8x4x8x4xf32, #tpu.memory_space<vmem>>, vector<1x1x1x1x8x4xf32>
    %67 = vector.shape_cast %66 : vector<1x1x1x1x8x4xf32> to vector<8x4xf32>
    %c8_167 = arith.constant 8 : index
    %c40_168 = arith.constant 40 : index
    %68 = vector.load %arg6[%c8_167, %c40_168] : memref<64x48xf32, #tpu.memory_space<vmem>>, vector<8x4xf32>
    tpu.vector_store %arg6[%c8_167, %c40_168], %67 {strides = array<i32>} : memref<64x48xf32, #tpu.memory_space<vmem>>, vector<8x4xf32>,
    %c0_169 = arith.constant 0 : index
    %c2_170 = arith.constant 2 : index
    %c1_171 = arith.constant 1 : index
    %c3_172 = arith.constant 3 : index
    %c0_173 = arith.constant 0 : index
    %c0_174 = arith.constant 0 : index
    %69 = vector.load %arg2[%c0_169, %c2_170, %c1_171, %c3_172, %c0_173, %c0_174] : memref<1x3x8x4x8x4xf32, #tpu.memory_space<vmem>>, vector<1x1x1x1x8x4xf32>
    %70 = vector.shape_cast %69 : vector<1x1x1x1x8x4xf32> to vector<8x4xf32>
    %c8_175 = arith.constant 8 : index
    %c44_176 = arith.constant 44 : index
    %71 = vector.load %arg6[%c8_175, %c44_176] : memref<64x48xf32, #tpu.memory_space<vmem>>, vector<8x4xf32>
    tpu.vector_store %arg6[%c8_175, %c44_176], %70 {strides = array<i32>} : memref<64x48xf32, #tpu.memory_space<vmem>>, vector<8x4xf32>,
    %c0_177 = arith.constant 0 : index
    %c0_178 = arith.constant 0 : index
    %c2_179 = arith.constant 2 : index
    %c0_180 = arith.constant 0 : index
    %c0_181 = arith.constant 0 : index
    %c0_182 = arith.constant 0 : index
    %72 = vector.load %arg2[%c0_177, %c0_178, %c2_179, %c0_180, %c0_181, %c0_182] : memref<1x3x8x4x8x4xf32, #tpu.memory_space<vmem>>, vector<1x1x1x1x8x4xf32>
    %73 = vector.shape_cast %72 : vector<1x1x1x1x8x4xf32> to vector<8x4xf32>
    %c16_183 = arith.constant 16 : index
    %c0_184 = arith.constant 0 : index
    %74 = vector.load %arg6[%c16_183, %c0_184] : memref<64x48xf32, #tpu.memory_space<vmem>>, vector<8x4xf32>
    tpu.vector_store %arg6[%c16_183, %c0_184], %73 {strides = array<i32>} : memref<64x48xf32, #tpu.memory_space<vmem>>, vector<8x4xf32>,
    %c0_185 = arith.constant 0 : index
    %c0_186 = arith.constant 0 : index
    %c2_187 = arith.constant 2 : index
    %c1_188 = arith.constant 1 : index
    %c0_189 = arith.constant 0 : index
    %c0_190 = arith.constant 0 : index
    %75 = vector.load %arg2[%c0_185, %c0_186, %c2_187, %c1_188, %c0_189, %c0_190] : memref<1x3x8x4x8x4xf32, #tpu.memory_space<vmem>>, vector<1x1x1x1x8x4xf32>
    %76 = vector.shape_cast %75 : vector<1x1x1x1x8x4xf32> to vector<8x4xf32>
    %c16_191 = arith.constant 16 : index
    %c4_192 = arith.constant 4 : index
    %77 = vector.load %arg6[%c16_191, %c4_192] : memref<64x48xf32, #tpu.memory_space<vmem>>, vector<8x4xf32>
    tpu.vector_store %arg6[%c16_191, %c4_192], %76 {strides = array<i32>} : memref<64x48xf32, #tpu.memory_space<vmem>>, vector<8x4xf32>,
    %c0_193 = arith.constant 0 : index
    %c0_194 = arith.constant 0 : index
    %c2_195 = arith.constant 2 : index
    %c2_196 = arith.constant 2 : index
    %c0_197 = arith.constant 0 : index
    %c0_198 = arith.constant 0 : index
    %78 = vector.load %arg2[%c0_193, %c0_194, %c2_195, %c2_196, %c0_197, %c0_198] : memref<1x3x8x4x8x4xf32, #tpu.memory_space<vmem>>, vector<1x1x1x1x8x4xf32>
    %79 = vector.shape_cast %78 : vector<1x1x1x1x8x4xf32> to vector<8x4xf32>
    %c16_199 = arith.constant 16 : index
    %c8_200 = arith.constant 8 : index
    %80 = vector.load %arg6[%c16_199, %c8_200] : memref<64x48xf32, #tpu.memory_space<vmem>>, vector<8x4xf32>
    tpu.vector_store %arg6[%c16_199, %c8_200], %79 {strides = array<i32>} : memref<64x48xf32, #tpu.memory_space<vmem>>, vector<8x4xf32>,
    %c0_201 = arith.constant 0 : index
    %c0_202 = arith.constant 0 : index
    %c2_203 = arith.constant 2 : index
    %c3_204 = arith.constant 3 : index
    %c0_205 = arith.constant 0 : index
    %c0_206 = arith.constant 0 : index
    %81 = vector.load %arg2[%c0_201, %c0_202, %c2_203, %c3_204, %c0_205, %c0_206] : memref<1x3x8x4x8x4xf32, #tpu.memory_space<vmem>>, vector<1x1x1x1x8x4xf32>
    %82 = vector.shape_cast %81 : vector<1x1x1x1x8x4xf32> to vector<8x4xf32>
    %c16_207 = arith.constant 16 : index
    %c12_208 = arith.constant 12 : index
    %83 = vector.load %arg6[%c16_207, %c12_208] : memref<64x48xf32, #tpu.memory_space<vmem>>, vector<8x4xf32>
    tpu.vector_store %arg6[%c16_207, %c12_208], %82 {strides = array<i32>} : memref<64x48xf32, #tpu.memory_space<vmem>>, vector<8x4xf32>,
    %c0_209 = arith.constant 0 : index
    %c1_210 = arith.constant 1 : index
    %c2_211 = arith.constant 2 : index
    %c0_212 = arith.constant 0 : index
    %c0_213 = arith.constant 0 : index
    %c0_214 = arith.constant 0 : index
    %84 = vector.load %arg2[%c0_209, %c1_210, %c2_211, %c0_212, %c0_213, %c0_214] : memref<1x3x8x4x8x4xf32, #tpu.memory_space<vmem>>, vector<1x1x1x1x8x4xf32>
    %85 = vector.shape_cast %84 : vector<1x1x1x1x8x4xf32> to vector<8x4xf32>
    %c16_215 = arith.constant 16 : index
    %c16_216 = arith.constant 16 : index
    %86 = vector.load %arg6[%c16_215, %c16_216] : memref<64x48xf32, #tpu.memory_space<vmem>>, vector<8x4xf32>
    tpu.vector_store %arg6[%c16_215, %c16_216], %85 {strides = array<i32>} : memref<64x48xf32, #tpu.memory_space<vmem>>, vector<8x4xf32>,
    %c0_217 = arith.constant 0 : index
    %c1_218 = arith.constant 1 : index
    %c2_219 = arith.constant 2 : index
    %c1_220 = arith.constant 1 : index
    %c0_221 = arith.constant 0 : index
    %c0_222 = arith.constant 0 : index
    %87 = vector.load %arg2[%c0_217, %c1_218, %c2_219, %c1_220, %c0_221, %c0_222] : memref<1x3x8x4x8x4xf32, #tpu.memory_space<vmem>>, vector<1x1x1x1x8x4xf32>
    %88 = vector.shape_cast %87 : vector<1x1x1x1x8x4xf32> to vector<8x4xf32>
    %c16_223 = arith.constant 16 : index
    %c20_224 = arith.constant 20 : index
    %89 = vector.load %arg6[%c16_223, %c20_224] : memref<64x48xf32, #tpu.memory_space<vmem>>, vector<8x4xf32>
    tpu.vector_store %arg6[%c16_223, %c20_224], %88 {strides = array<i32>} : memref<64x48xf32, #tpu.memory_space<vmem>>, vector<8x4xf32>,
    %c0_225 = arith.constant 0 : index
    %c1_226 = arith.constant 1 : index
    %c2_227 = arith.constant 2 : index
    %c2_228 = arith.constant 2 : index
    %c0_229 = arith.constant 0 : index
    %c0_230 = arith.constant 0 : index
    %90 = vector.load %arg2[%c0_225, %c1_226, %c2_227, %c2_228, %c0_229, %c0_230] : memref<1x3x8x4x8x4xf32, #tpu.memory_space<vmem>>, vector<1x1x1x1x8x4xf32>
    %91 = vector.shape_cast %90 : vector<1x1x1x1x8x4xf32> to vector<8x4xf32>
    %c16_231 = arith.constant 16 : index
    %c24_232 = arith.constant 24 : index
    %92 = vector.load %arg6[%c16_231, %c24_232] : memref<64x48xf32, #tpu.memory_space<vmem>>, vector<8x4xf32>
    tpu.vector_store %arg6[%c16_231, %c24_232], %91 {strides = array<i32>} : memref<64x48xf32, #tpu.memory_space<vmem>>, vector<8x4xf32>,
    %c0_233 = arith.constant 0 : index
    %c1_234 = arith.constant 1 : index
    %c2_235 = arith.constant 2 : index
    %c3_236 = arith.constant 3 : index
    %c0_237 = arith.constant 0 : index
    %c0_238 = arith.constant 0 : index
    %93 = vector.load %arg2[%c0_233, %c1_234, %c2_235, %c3_236, %c0_237, %c0_238] : memref<1x3x8x4x8x4xf32, #tpu.memory_space<vmem>>, vector<1x1x1x1x8x4xf32>
    %94 = vector.shape_cast %93 : vector<1x1x1x1x8x4xf32> to vector<8x4xf32>
    %c16_239 = arith.constant 16 : index
    %c28_240 = arith.constant 28 : index
    %95 = vector.load %arg6[%c16_239, %c28_240] : memref<64x48xf32, #tpu.memory_space<vmem>>, vector<8x4xf32>
    tpu.vector_store %arg6[%c16_239, %c28_240], %94 {strides = array<i32>} : memref<64x48xf32, #tpu.memory_space<vmem>>, vector<8x4xf32>,
    %c0_241 = arith.constant 0 : index
    %c2_242 = arith.constant 2 : index
    %c2_243 = arith.constant 2 : index
    %c0_244 = arith.constant 0 : index
    %c0_245 = arith.constant 0 : index
    %c0_246 = arith.constant 0 : index
    %96 = vector.load %arg2[%c0_241, %c2_242, %c2_243, %c0_244, %c0_245, %c0_246] : memref<1x3x8x4x8x4xf32, #tpu.memory_space<vmem>>, vector<1x1x1x1x8x4xf32>
    %97 = vector.shape_cast %96 : vector<1x1x1x1x8x4xf32> to vector<8x4xf32>
    %c16_247 = arith.constant 16 : index
    %c32_248 = arith.constant 32 : index
    %98 = vector.load %arg6[%c16_247, %c32_248] : memref<64x48xf32, #tpu.memory_space<vmem>>, vector<8x4xf32>
    tpu.vector_store %arg6[%c16_247, %c32_248], %97 {strides = array<i32>} : memref<64x48xf32, #tpu.memory_space<vmem>>, vector<8x4xf32>,
    %c0_249 = arith.constant 0 : index
    %c2_250 = arith.constant 2 : index
    %c2_251 = arith.constant 2 : index
    %c1_252 = arith.constant 1 : index
    %c0_253 = arith.constant 0 : index
    %c0_254 = arith.constant 0 : index
    %99 = vector.load %arg2[%c0_249, %c2_250, %c2_251, %c1_252, %c0_253, %c0_254] : memref<1x3x8x4x8x4xf32, #tpu.memory_space<vmem>>, vector<1x1x1x1x8x4xf32>
    %100 = vector.shape_cast %99 : vector<1x1x1x1x8x4xf32> to vector<8x4xf32>
    %c16_255 = arith.constant 16 : index
    %c36_256 = arith.constant 36 : index
    %101 = vector.load %arg6[%c16_255, %c36_256] : memref<64x48xf32, #tpu.memory_space<vmem>>, vector<8x4xf32>
    tpu.vector_store %arg6[%c16_255, %c36_256], %100 {strides = array<i32>} : memref<64x48xf32, #tpu.memory_space<vmem>>, vector<8x4xf32>,
    %c0_257 = arith.constant 0 : index
    %c2_258 = arith.constant 2 : index
    %c2_259 = arith.constant 2 : index
    %c2_260 = arith.constant 2 : index
    %c0_261 = arith.constant 0 : index
    %c0_262 = arith.constant 0 : index
    %102 = vector.load %arg2[%c0_257, %c2_258, %c2_259, %c2_260, %c0_261, %c0_262] : memref<1x3x8x4x8x4xf32, #tpu.memory_space<vmem>>, vector<1x1x1x1x8x4xf32>
    %103 = vector.shape_cast %102 : vector<1x1x1x1x8x4xf32> to vector<8x4xf32>
    %c16_263 = arith.constant 16 : index
    %c40_264 = arith.constant 40 : index
    %104 = vector.load %arg6[%c16_263, %c40_264] : memref<64x48xf32, #tpu.memory_space<vmem>>, vector<8x4xf32>
    tpu.vector_store %arg6[%c16_263, %c40_264], %103 {strides = array<i32>} : memref<64x48xf32, #tpu.memory_space<vmem>>, vector<8x4xf32>,
    %c0_265 = arith.constant 0 : index
    %c2_266 = arith.constant 2 : index
    %c2_267 = arith.constant 2 : index
    %c3_268 = arith.constant 3 : index
    %c0_269 = arith.constant 0 : index
    %c0_270 = arith.constant 0 : index
    %105 = vector.load %arg2[%c0_265, %c2_266, %c2_267, %c3_268, %c0_269, %c0_270] : memref<1x3x8x4x8x4xf32, #tpu.memory_space<vmem>>, vector<1x1x1x1x8x4xf32>
    %106 = vector.shape_cast %105 : vector<1x1x1x1x8x4xf32> to vector<8x4xf32>
    %c16_271 = arith.constant 16 : index
    %c44_272 = arith.constant 44 : index
    %107 = vector.load %arg6[%c16_271, %c44_272] : memref<64x48xf32, #tpu.memory_space<vmem>>, vector<8x4xf32>
    tpu.vector_store %arg6[%c16_271, %c44_272], %106 {strides = array<i32>} : memref<64x48xf32, #tpu.memory_space<vmem>>, vector<8x4xf32>,
    %c0_273 = arith.constant 0 : index
    %c0_274 = arith.constant 0 : index
    %c3_275 = arith.constant 3 : index
    %c0_276 = arith.constant 0 : index
    %c0_277 = arith.constant 0 : index
    %c0_278 = arith.constant 0 : index
    %108 = vector.load %arg2[%c0_273, %c0_274, %c3_275, %c0_276, %c0_277, %c0_278] : memref<1x3x8x4x8x4xf32, #tpu.memory_space<vmem>>, vector<1x1x1x1x8x4xf32>
    %109 = vector.shape_cast %108 : vector<1x1x1x1x8x4xf32> to vector<8x4xf32>
    %c24_279 = arith.constant 24 : index
    %c0_280 = arith.constant 0 : index
    %110 = vector.load %arg6[%c24_279, %c0_280] : memref<64x48xf32, #tpu.memory_space<vmem>>, vector<8x4xf32>
    tpu.vector_store %arg6[%c24_279, %c0_280], %109 {strides = array<i32>} : memref<64x48xf32, #tpu.memory_space<vmem>>, vector<8x4xf32>,
    %c0_281 = arith.constant 0 : index
    %c0_282 = arith.constant 0 : index
    %c3_283 = arith.constant 3 : index
    %c1_284 = arith.constant 1 : index
    %c0_285 = arith.constant 0 : index
    %c0_286 = arith.constant 0 : index
    %111 = vector.load %arg2[%c0_281, %c0_282, %c3_283, %c1_284, %c0_285, %c0_286] : memref<1x3x8x4x8x4xf32, #tpu.memory_space<vmem>>, vector<1x1x1x1x8x4xf32>
    %112 = vector.shape_cast %111 : vector<1x1x1x1x8x4xf32> to vector<8x4xf32>
    %c24_287 = arith.constant 24 : index
    %c4_288 = arith.constant 4 : index
    %113 = vector.load %arg6[%c24_287, %c4_288] : memref<64x48xf32, #tpu.memory_space<vmem>>, vector<8x4xf32>
    tpu.vector_store %arg6[%c24_287, %c4_288], %112 {strides = array<i32>} : memref<64x48xf32, #tpu.memory_space<vmem>>, vector<8x4xf32>,
    %c0_289 = arith.constant 0 : index
    %c0_290 = arith.constant 0 : index
    %c3_291 = arith.constant 3 : index
    %c2_292 = arith.constant 2 : index
    %c0_293 = arith.constant 0 : index
    %c0_294 = arith.constant 0 : index
    %114 = vector.load %arg2[%c0_289, %c0_290, %c3_291, %c2_292, %c0_293, %c0_294] : memref<1x3x8x4x8x4xf32, #tpu.memory_space<vmem>>, vector<1x1x1x1x8x4xf32>
    %115 = vector.shape_cast %114 : vector<1x1x1x1x8x4xf32> to vector<8x4xf32>
    %c24_295 = arith.constant 24 : index
    %c8_296 = arith.constant 8 : index
    %116 = vector.load %arg6[%c24_295, %c8_296] : memref<64x48xf32, #tpu.memory_space<vmem>>, vector<8x4xf32>
    tpu.vector_store %arg6[%c24_295, %c8_296], %115 {strides = array<i32>} : memref<64x48xf32, #tpu.memory_space<vmem>>, vector<8x4xf32>,
    %c0_297 = arith.constant 0 : index
    %c0_298 = arith.constant 0 : index
    %c3_299 = arith.constant 3 : index
    %c3_300 = arith.constant 3 : index
    %c0_301 = arith.constant 0 : index
    %c0_302 = arith.constant 0 : index
    %117 = vector.load %arg2[%c0_297, %c0_298, %c3_299, %c3_300, %c0_301, %c0_302] : memref<1x3x8x4x8x4xf32, #tpu.memory_space<vmem>>, vector<1x1x1x1x8x4xf32>
    %118 = vector.shape_cast %117 : vector<1x1x1x1x8x4xf32> to vector<8x4xf32>
    %c24_303 = arith.constant 24 : index
    %c12_304 = arith.constant 12 : index
    %119 = vector.load %arg6[%c24_303, %c12_304] : memref<64x48xf32, #tpu.memory_space<vmem>>, vector<8x4xf32>
    tpu.vector_store %arg6[%c24_303, %c12_304], %118 {strides = array<i32>} : memref<64x48xf32, #tpu.memory_space<vmem>>, vector<8x4xf32>,
    %c0_305 = arith.constant 0 : index
    %c1_306 = arith.constant 1 : index
    %c3_307 = arith.constant 3 : index
    %c0_308 = arith.constant 0 : index
    %c0_309 = arith.constant 0 : index
    %c0_310 = arith.constant 0 : index
    %120 = vector.load %arg2[%c0_305, %c1_306, %c3_307, %c0_308, %c0_309, %c0_310] : memref<1x3x8x4x8x4xf32, #tpu.memory_space<vmem>>, vector<1x1x1x1x8x4xf32>
    %121 = vector.shape_cast %120 : vector<1x1x1x1x8x4xf32> to vector<8x4xf32>
    %c24_311 = arith.constant 24 : index
    %c16_312 = arith.constant 16 : index
    %122 = vector.load %arg6[%c24_311, %c16_312] : memref<64x48xf32, #tpu.memory_space<vmem>>, vector<8x4xf32>
    tpu.vector_store %arg6[%c24_311, %c16_312], %121 {strides = array<i32>} : memref<64x48xf32, #tpu.memory_space<vmem>>, vector<8x4xf32>,
    %c0_313 = arith.constant 0 : index
    %c1_314 = arith.constant 1 : index
    %c3_315 = arith.constant 3 : index
    %c1_316 = arith.constant 1 : index
    %c0_317 = arith.constant 0 : index
    %c0_318 = arith.constant 0 : index
    %123 = vector.load %arg2[%c0_313, %c1_314, %c3_315, %c1_316, %c0_317, %c0_318] : memref<1x3x8x4x8x4xf32, #tpu.memory_space<vmem>>, vector<1x1x1x1x8x4xf32>
    %124 = vector.shape_cast %123 : vector<1x1x1x1x8x4xf32> to vector<8x4xf32>
    %c24_319 = arith.constant 24 : index
    %c20_320 = arith.constant 20 : index
    %125 = vector.load %arg6[%c24_319, %c20_320] : memref<64x48xf32, #tpu.memory_space<vmem>>, vector<8x4xf32>
    tpu.vector_store %arg6[%c24_319, %c20_320], %124 {strides = array<i32>} : memref<64x48xf32, #tpu.memory_space<vmem>>, vector<8x4xf32>,
    %c0_321 = arith.constant 0 : index
    %c1_322 = arith.constant 1 : index
    %c3_323 = arith.constant 3 : index
    %c2_324 = arith.constant 2 : index
    %c0_325 = arith.constant 0 : index
    %c0_326 = arith.constant 0 : index
    %126 = vector.load %arg2[%c0_321, %c1_322, %c3_323, %c2_324, %c0_325, %c0_326] : memref<1x3x8x4x8x4xf32, #tpu.memory_space<vmem>>, vector<1x1x1x1x8x4xf32>
    %127 = vector.shape_cast %126 : vector<1x1x1x1x8x4xf32> to vector<8x4xf32>
    %c24_327 = arith.constant 24 : index
    %c24_328 = arith.constant 24 : index
    %128 = vector.load %arg6[%c24_327, %c24_328] : memref<64x48xf32, #tpu.memory_space<vmem>>, vector<8x4xf32>
    tpu.vector_store %arg6[%c24_327, %c24_328], %127 {strides = array<i32>} : memref<64x48xf32, #tpu.memory_space<vmem>>, vector<8x4xf32>,
    %c0_329 = arith.constant 0 : index
    %c1_330 = arith.constant 1 : index
    %c3_331 = arith.constant 3 : index
    %c3_332 = arith.constant 3 : index
    %c0_333 = arith.constant 0 : index
    %c0_334 = arith.constant 0 : index
    %129 = vector.load %arg2[%c0_329, %c1_330, %c3_331, %c3_332, %c0_333, %c0_334] : memref<1x3x8x4x8x4xf32, #tpu.memory_space<vmem>>, vector<1x1x1x1x8x4xf32>
    %130 = vector.shape_cast %129 : vector<1x1x1x1x8x4xf32> to vector<8x4xf32>
    %c24_335 = arith.constant 24 : index
    %c28_336 = arith.constant 28 : index
    %131 = vector.load %arg6[%c24_335, %c28_336] : memref<64x48xf32, #tpu.memory_space<vmem>>, vector<8x4xf32>
    tpu.vector_store %arg6[%c24_335, %c28_336], %130 {strides = array<i32>} : memref<64x48xf32, #tpu.memory_space<vmem>>, vector<8x4xf32>,
    %c0_337 = arith.constant 0 : index
    %c2_338 = arith.constant 2 : index
    %c3_339 = arith.constant 3 : index
    %c0_340 = arith.constant 0 : index
    %c0_341 = arith.constant 0 : index
    %c0_342 = arith.constant 0 : index
    %132 = vector.load %arg2[%c0_337, %c2_338, %c3_339, %c0_340, %c0_341, %c0_342] : memref<1x3x8x4x8x4xf32, #tpu.memory_space<vmem>>, vector<1x1x1x1x8x4xf32>
    %133 = vector.shape_cast %132 : vector<1x1x1x1x8x4xf32> to vector<8x4xf32>
    %c24_343 = arith.constant 24 : index
    %c32_344 = arith.constant 32 : index
    %134 = vector.load %arg6[%c24_343, %c32_344] : memref<64x48xf32, #tpu.memory_space<vmem>>, vector<8x4xf32>
    tpu.vector_store %arg6[%c24_343, %c32_344], %133 {strides = array<i32>} : memref<64x48xf32, #tpu.memory_space<vmem>>, vector<8x4xf32>,
    %c0_345 = arith.constant 0 : index
    %c2_346 = arith.constant 2 : index
    %c3_347 = arith.constant 3 : index
    %c1_348 = arith.constant 1 : index
    %c0_349 = arith.constant 0 : index
    %c0_350 = arith.constant 0 : index
    %135 = vector.load %arg2[%c0_345, %c2_346, %c3_347, %c1_348, %c0_349, %c0_350] : memref<1x3x8x4x8x4xf32, #tpu.memory_space<vmem>>, vector<1x1x1x1x8x4xf32>
    %136 = vector.shape_cast %135 : vector<1x1x1x1x8x4xf32> to vector<8x4xf32>
    %c24_351 = arith.constant 24 : index
    %c36_352 = arith.constant 36 : index
    %137 = vector.load %arg6[%c24_351, %c36_352] : memref<64x48xf32, #tpu.memory_space<vmem>>, vector<8x4xf32>
    tpu.vector_store %arg6[%c24_351, %c36_352], %136 {strides = array<i32>} : memref<64x48xf32, #tpu.memory_space<vmem>>, vector<8x4xf32>,
    %c0_353 = arith.constant 0 : index
    %c2_354 = arith.constant 2 : index
    %c3_355 = arith.constant 3 : index
    %c2_356 = arith.constant 2 : index
    %c0_357 = arith.constant 0 : index
    %c0_358 = arith.constant 0 : index
    %138 = vector.load %arg2[%c0_353, %c2_354, %c3_355, %c2_356, %c0_357, %c0_358] : memref<1x3x8x4x8x4xf32, #tpu.memory_space<vmem>>, vector<1x1x1x1x8x4xf32>
    %139 = vector.shape_cast %138 : vector<1x1x1x1x8x4xf32> to vector<8x4xf32>
    %c24_359 = arith.constant 24 : index
    %c40_360 = arith.constant 40 : index
    %140 = vector.load %arg6[%c24_359, %c40_360] : memref<64x48xf32, #tpu.memory_space<vmem>>, vector<8x4xf32>
    tpu.vector_store %arg6[%c24_359, %c40_360], %139 {strides = array<i32>} : memref<64x48xf32, #tpu.memory_space<vmem>>, vector<8x4xf32>,
    %c0_361 = arith.constant 0 : index
    %c2_362 = arith.constant 2 : index
    %c3_363 = arith.constant 3 : index
    %c3_364 = arith.constant 3 : index
    %c0_365 = arith.constant 0 : index
    %c0_366 = arith.constant 0 : index
    %141 = vector.load %arg2[%c0_361, %c2_362, %c3_363, %c3_364, %c0_365, %c0_366] : memref<1x3x8x4x8x4xf32, #tpu.memory_space<vmem>>, vector<1x1x1x1x8x4xf32>
    %142 = vector.shape_cast %141 : vector<1x1x1x1x8x4xf32> to vector<8x4xf32>
    %c24_367 = arith.constant 24 : index
    %c44_368 = arith.constant 44 : index
    %143 = vector.load %arg6[%c24_367, %c44_368] : memref<64x48xf32, #tpu.memory_space<vmem>>, vector<8x4xf32>
    tpu.vector_store %arg6[%c24_367, %c44_368], %142 {strides = array<i32>} : memref<64x48xf32, #tpu.memory_space<vmem>>, vector<8x4xf32>,
    %c0_369 = arith.constant 0 : index
    %c0_370 = arith.constant 0 : index
    %c4_371 = arith.constant 4 : index
    %c0_372 = arith.constant 0 : index
    %c0_373 = arith.constant 0 : index
    %c0_374 = arith.constant 0 : index
    %144 = vector.load %arg2[%c0_369, %c0_370, %c4_371, %c0_372, %c0_373, %c0_374] : memref<1x3x8x4x8x4xf32, #tpu.memory_space<vmem>>, vector<1x1x1x1x8x4xf32>
    %145 = vector.shape_cast %144 : vector<1x1x1x1x8x4xf32> to vector<8x4xf32>
    %c32_375 = arith.constant 32 : index
    %c0_376 = arith.constant 0 : index
    %146 = vector.load %arg6[%c32_375, %c0_376] : memref<64x48xf32, #tpu.memory_space<vmem>>, vector<8x4xf32>
    tpu.vector_store %arg6[%c32_375, %c0_376], %145 {strides = array<i32>} : memref<64x48xf32, #tpu.memory_space<vmem>>, vector<8x4xf32>,
    %c0_377 = arith.constant 0 : index
    %c0_378 = arith.constant 0 : index
    %c4_379 = arith.constant 4 : index
    %c1_380 = arith.constant 1 : index
    %c0_381 = arith.constant 0 : index
    %c0_382 = arith.constant 0 : index
    %147 = vector.load %arg2[%c0_377, %c0_378, %c4_379, %c1_380, %c0_381, %c0_382] : memref<1x3x8x4x8x4xf32, #tpu.memory_space<vmem>>, vector<1x1x1x1x8x4xf32>
    %148 = vector.shape_cast %147 : vector<1x1x1x1x8x4xf32> to vector<8x4xf32>
    %c32_383 = arith.constant 32 : index
    %c4_384 = arith.constant 4 : index
    %149 = vector.load %arg6[%c32_383, %c4_384] : memref<64x48xf32, #tpu.memory_space<vmem>>, vector<8x4xf32>
    tpu.vector_store %arg6[%c32_383, %c4_384], %148 {strides = array<i32>} : memref<64x48xf32, #tpu.memory_space<vmem>>, vector<8x4xf32>,
    %c0_385 = arith.constant 0 : index
    %c0_386 = arith.constant 0 : index
    %c4_387 = arith.constant 4 : index
    %c2_388 = arith.constant 2 : index
    %c0_389 = arith.constant 0 : index
    %c0_390 = arith.constant 0 : index
    %150 = vector.load %arg2[%c0_385, %c0_386, %c4_387, %c2_388, %c0_389, %c0_390] : memref<1x3x8x4x8x4xf32, #tpu.memory_space<vmem>>, vector<1x1x1x1x8x4xf32>
    %151 = vector.shape_cast %150 : vector<1x1x1x1x8x4xf32> to vector<8x4xf32>
    %c32_391 = arith.constant 32 : index
    %c8_392 = arith.constant 8 : index
    %152 = vector.load %arg6[%c32_391, %c8_392] : memref<64x48xf32, #tpu.memory_space<vmem>>, vector<8x4xf32>
    tpu.vector_store %arg6[%c32_391, %c8_392], %151 {strides = array<i32>} : memref<64x48xf32, #tpu.memory_space<vmem>>, vector<8x4xf32>,
    %c0_393 = arith.constant 0 : index
    %c0_394 = arith.constant 0 : index
    %c4_395 = arith.constant 4 : index
    %c3_396 = arith.constant 3 : index
    %c0_397 = arith.constant 0 : index
    %c0_398 = arith.constant 0 : index
    %153 = vector.load %arg2[%c0_393, %c0_394, %c4_395, %c3_396, %c0_397, %c0_398] : memref<1x3x8x4x8x4xf32, #tpu.memory_space<vmem>>, vector<1x1x1x1x8x4xf32>
    %154 = vector.shape_cast %153 : vector<1x1x1x1x8x4xf32> to vector<8x4xf32>
    %c32_399 = arith.constant 32 : index
    %c12_400 = arith.constant 12 : index
    %155 = vector.load %arg6[%c32_399, %c12_400] : memref<64x48xf32, #tpu.memory_space<vmem>>, vector<8x4xf32>
    tpu.vector_store %arg6[%c32_399, %c12_400], %154 {strides = array<i32>} : memref<64x48xf32, #tpu.memory_space<vmem>>, vector<8x4xf32>,
    %c0_401 = arith.constant 0 : index
    %c1_402 = arith.constant 1 : index
    %c4_403 = arith.constant 4 : index
    %c0_404 = arith.constant 0 : index
    %c0_405 = arith.constant 0 : index
    %c0_406 = arith.constant 0 : index
    %156 = vector.load %arg2[%c0_401, %c1_402, %c4_403, %c0_404, %c0_405, %c0_406] : memref<1x3x8x4x8x4xf32, #tpu.memory_space<vmem>>, vector<1x1x1x1x8x4xf32>
    %157 = vector.shape_cast %156 : vector<1x1x1x1x8x4xf32> to vector<8x4xf32>
    %c32_407 = arith.constant 32 : index
    %c16_408 = arith.constant 16 : index
    %158 = vector.load %arg6[%c32_407, %c16_408] : memref<64x48xf32, #tpu.memory_space<vmem>>, vector<8x4xf32>
    tpu.vector_store %arg6[%c32_407, %c16_408], %157 {strides = array<i32>} : memref<64x48xf32, #tpu.memory_space<vmem>>, vector<8x4xf32>,
    %c0_409 = arith.constant 0 : index
    %c1_410 = arith.constant 1 : index
    %c4_411 = arith.constant 4 : index
    %c1_412 = arith.constant 1 : index
    %c0_413 = arith.constant 0 : index
    %c0_414 = arith.constant 0 : index
    %159 = vector.load %arg2[%c0_409, %c1_410, %c4_411, %c1_412, %c0_413, %c0_414] : memref<1x3x8x4x8x4xf32, #tpu.memory_space<vmem>>, vector<1x1x1x1x8x4xf32>
    %160 = vector.shape_cast %159 : vector<1x1x1x1x8x4xf32> to vector<8x4xf32>
    %c32_415 = arith.constant 32 : index
    %c20_416 = arith.constant 20 : index
    %161 = vector.load %arg6[%c32_415, %c20_416] : memref<64x48xf32, #tpu.memory_space<vmem>>, vector<8x4xf32>
    tpu.vector_store %arg6[%c32_415, %c20_416], %160 {strides = array<i32>} : memref<64x48xf32, #tpu.memory_space<vmem>>, vector<8x4xf32>,
    %c0_417 = arith.constant 0 : index
    %c1_418 = arith.constant 1 : index
    %c4_419 = arith.constant 4 : index
    %c2_420 = arith.constant 2 : index
    %c0_421 = arith.constant 0 : index
    %c0_422 = arith.constant 0 : index
    %162 = vector.load %arg2[%c0_417, %c1_418, %c4_419, %c2_420, %c0_421, %c0_422] : memref<1x3x8x4x8x4xf32, #tpu.memory_space<vmem>>, vector<1x1x1x1x8x4xf32>
    %163 = vector.shape_cast %162 : vector<1x1x1x1x8x4xf32> to vector<8x4xf32>
    %c32_423 = arith.constant 32 : index
    %c24_424 = arith.constant 24 : index
    %164 = vector.load %arg6[%c32_423, %c24_424] : memref<64x48xf32, #tpu.memory_space<vmem>>, vector<8x4xf32>
    tpu.vector_store %arg6[%c32_423, %c24_424], %163 {strides = array<i32>} : memref<64x48xf32, #tpu.memory_space<vmem>>, vector<8x4xf32>,
    %c0_425 = arith.constant 0 : index
    %c1_426 = arith.constant 1 : index
    %c4_427 = arith.constant 4 : index
    %c3_428 = arith.constant 3 : index
    %c0_429 = arith.constant 0 : index
    %c0_430 = arith.constant 0 : index
    %165 = vector.load %arg2[%c0_425, %c1_426, %c4_427, %c3_428, %c0_429, %c0_430] : memref<1x3x8x4x8x4xf32, #tpu.memory_space<vmem>>, vector<1x1x1x1x8x4xf32>
    %166 = vector.shape_cast %165 : vector<1x1x1x1x8x4xf32> to vector<8x4xf32>
    %c32_431 = arith.constant 32 : index
    %c28_432 = arith.constant 28 : index
    %167 = vector.load %arg6[%c32_431, %c28_432] : memref<64x48xf32, #tpu.memory_space<vmem>>, vector<8x4xf32>
    tpu.vector_store %arg6[%c32_431, %c28_432], %166 {strides = array<i32>} : memref<64x48xf32, #tpu.memory_space<vmem>>, vector<8x4xf32>,
    %c0_433 = arith.constant 0 : index
    %c2_434 = arith.constant 2 : index
    %c4_435 = arith.constant 4 : index
    %c0_436 = arith.constant 0 : index
    %c0_437 = arith.constant 0 : index
    %c0_438 = arith.constant 0 : index
    %168 = vector.load %arg2[%c0_433, %c2_434, %c4_435, %c0_436, %c0_437, %c0_438] : memref<1x3x8x4x8x4xf32, #tpu.memory_space<vmem>>, vector<1x1x1x1x8x4xf32>
    %169 = vector.shape_cast %168 : vector<1x1x1x1x8x4xf32> to vector<8x4xf32>
    %c32_439 = arith.constant 32 : index
    %c32_440 = arith.constant 32 : index
    %170 = vector.load %arg6[%c32_439, %c32_440] : memref<64x48xf32, #tpu.memory_space<vmem>>, vector<8x4xf32>
    tpu.vector_store %arg6[%c32_439, %c32_440], %169 {strides = array<i32>} : memref<64x48xf32, #tpu.memory_space<vmem>>, vector<8x4xf32>,
    %c0_441 = arith.constant 0 : index
    %c2_442 = arith.constant 2 : index
    %c4_443 = arith.constant 4 : index
    %c1_444 = arith.constant 1 : index
    %c0_445 = arith.constant 0 : index
    %c0_446 = arith.constant 0 : index
    %171 = vector.load %arg2[%c0_441, %c2_442, %c4_443, %c1_444, %c0_445, %c0_446] : memref<1x3x8x4x8x4xf32, #tpu.memory_space<vmem>>, vector<1x1x1x1x8x4xf32>
    %172 = vector.shape_cast %171 : vector<1x1x1x1x8x4xf32> to vector<8x4xf32>
    %c32_447 = arith.constant 32 : index
    %c36_448 = arith.constant 36 : index
    %173 = vector.load %arg6[%c32_447, %c36_448] : memref<64x48xf32, #tpu.memory_space<vmem>>, vector<8x4xf32>
    tpu.vector_store %arg6[%c32_447, %c36_448], %172 {strides = array<i32>} : memref<64x48xf32, #tpu.memory_space<vmem>>, vector<8x4xf32>,
    %c0_449 = arith.constant 0 : index
    %c2_450 = arith.constant 2 : index
    %c4_451 = arith.constant 4 : index
    %c2_452 = arith.constant 2 : index
    %c0_453 = arith.constant 0 : index
    %c0_454 = arith.constant 0 : index
    %174 = vector.load %arg2[%c0_449, %c2_450, %c4_451, %c2_452, %c0_453, %c0_454] : memref<1x3x8x4x8x4xf32, #tpu.memory_space<vmem>>, vector<1x1x1x1x8x4xf32>
    %175 = vector.shape_cast %174 : vector<1x1x1x1x8x4xf32> to vector<8x4xf32>
    %c32_455 = arith.constant 32 : index
    %c40_456 = arith.constant 40 : index
    %176 = vector.load %arg6[%c32_455, %c40_456] : memref<64x48xf32, #tpu.memory_space<vmem>>, vector<8x4xf32>
    tpu.vector_store %arg6[%c32_455, %c40_456], %175 {strides = array<i32>} : memref<64x48xf32, #tpu.memory_space<vmem>>, vector<8x4xf32>,
    %c0_457 = arith.constant 0 : index
    %c2_458 = arith.constant 2 : index
    %c4_459 = arith.constant 4 : index
    %c3_460 = arith.constant 3 : index
    %c0_461 = arith.constant 0 : index
    %c0_462 = arith.constant 0 : index
    %177 = vector.load %arg2[%c0_457, %c2_458, %c4_459, %c3_460, %c0_461, %c0_462] : memref<1x3x8x4x8x4xf32, #tpu.memory_space<vmem>>, vector<1x1x1x1x8x4xf32>
    %178 = vector.shape_cast %177 : vector<1x1x1x1x8x4xf32> to vector<8x4xf32>
    %c32_463 = arith.constant 32 : index
    %c44_464 = arith.constant 44 : index
    %179 = vector.load %arg6[%c32_463, %c44_464] : memref<64x48xf32, #tpu.memory_space<vmem>>, vector<8x4xf32>
    tpu.vector_store %arg6[%c32_463, %c44_464], %178 {strides = array<i32>} : memref<64x48xf32, #tpu.memory_space<vmem>>, vector<8x4xf32>,
    %c0_465 = arith.constant 0 : index
    %c0_466 = arith.constant 0 : index
    %c5 = arith.constant 5 : index
    %c0_467 = arith.constant 0 : index
    %c0_468 = arith.constant 0 : index
    %c0_469 = arith.constant 0 : index
    %180 = vector.load %arg2[%c0_465, %c0_466, %c5, %c0_467, %c0_468, %c0_469] : memref<1x3x8x4x8x4xf32, #tpu.memory_space<vmem>>, vector<1x1x1x1x8x4xf32>
    %181 = vector.shape_cast %180 : vector<1x1x1x1x8x4xf32> to vector<8x4xf32>
    %c40_470 = arith.constant 40 : index
    %c0_471 = arith.constant 0 : index
    %182 = vector.load %arg6[%c40_470, %c0_471] : memref<64x48xf32, #tpu.memory_space<vmem>>, vector<8x4xf32>
    tpu.vector_store %arg6[%c40_470, %c0_471], %181 {strides = array<i32>} : memref<64x48xf32, #tpu.memory_space<vmem>>, vector<8x4xf32>,
    %c0_472 = arith.constant 0 : index
    %c0_473 = arith.constant 0 : index
    %c5_474 = arith.constant 5 : index
    %c1_475 = arith.constant 1 : index
    %c0_476 = arith.constant 0 : index
    %c0_477 = arith.constant 0 : index
    %183 = vector.load %arg2[%c0_472, %c0_473, %c5_474, %c1_475, %c0_476, %c0_477] : memref<1x3x8x4x8x4xf32, #tpu.memory_space<vmem>>, vector<1x1x1x1x8x4xf32>
    %184 = vector.shape_cast %183 : vector<1x1x1x1x8x4xf32> to vector<8x4xf32>
    %c40_478 = arith.constant 40 : index
    %c4_479 = arith.constant 4 : index
    %185 = vector.load %arg6[%c40_478, %c4_479] : memref<64x48xf32, #tpu.memory_space<vmem>>, vector<8x4xf32>
    tpu.vector_store %arg6[%c40_478, %c4_479], %184 {strides = array<i32>} : memref<64x48xf32, #tpu.memory_space<vmem>>, vector<8x4xf32>,
    %c0_480 = arith.constant 0 : index
    %c0_481 = arith.constant 0 : index
    %c5_482 = arith.constant 5 : index
    %c2_483 = arith.constant 2 : index
    %c0_484 = arith.constant 0 : index
    %c0_485 = arith.constant 0 : index
    %186 = vector.load %arg2[%c0_480, %c0_481, %c5_482, %c2_483, %c0_484, %c0_485] : memref<1x3x8x4x8x4xf32, #tpu.memory_space<vmem>>, vector<1x1x1x1x8x4xf32>
    %187 = vector.shape_cast %186 : vector<1x1x1x1x8x4xf32> to vector<8x4xf32>
    %c40_486 = arith.constant 40 : index
    %c8_487 = arith.constant 8 : index
    %188 = vector.load %arg6[%c40_486, %c8_487] : memref<64x48xf32, #tpu.memory_space<vmem>>, vector<8x4xf32>
    tpu.vector_store %arg6[%c40_486, %c8_487], %187 {strides = array<i32>} : memref<64x48xf32, #tpu.memory_space<vmem>>, vector<8x4xf32>,
    %c0_488 = arith.constant 0 : index
    %c0_489 = arith.constant 0 : index
    %c5_490 = arith.constant 5 : index
    %c3_491 = arith.constant 3 : index
    %c0_492 = arith.constant 0 : index
    %c0_493 = arith.constant 0 : index
    %189 = vector.load %arg2[%c0_488, %c0_489, %c5_490, %c3_491, %c0_492, %c0_493] : memref<1x3x8x4x8x4xf32, #tpu.memory_space<vmem>>, vector<1x1x1x1x8x4xf32>
    %190 = vector.shape_cast %189 : vector<1x1x1x1x8x4xf32> to vector<8x4xf32>
    %c40_494 = arith.constant 40 : index
    %c12_495 = arith.constant 12 : index
    %191 = vector.load %arg6[%c40_494, %c12_495] : memref<64x48xf32, #tpu.memory_space<vmem>>, vector<8x4xf32>
    tpu.vector_store %arg6[%c40_494, %c12_495], %190 {strides = array<i32>} : memref<64x48xf32, #tpu.memory_space<vmem>>, vector<8x4xf32>,
    %c0_496 = arith.constant 0 : index
    %c1_497 = arith.constant 1 : index
    %c5_498 = arith.constant 5 : index
    %c0_499 = arith.constant 0 : index
    %c0_500 = arith.constant 0 : index
    %c0_501 = arith.constant 0 : index
    %192 = vector.load %arg2[%c0_496, %c1_497, %c5_498, %c0_499, %c0_500, %c0_501] : memref<1x3x8x4x8x4xf32, #tpu.memory_space<vmem>>, vector<1x1x1x1x8x4xf32>
    %193 = vector.shape_cast %192 : vector<1x1x1x1x8x4xf32> to vector<8x4xf32>
    %c40_502 = arith.constant 40 : index
    %c16_503 = arith.constant 16 : index
    %194 = vector.load %arg6[%c40_502, %c16_503] : memref<64x48xf32, #tpu.memory_space<vmem>>, vector<8x4xf32>
    tpu.vector_store %arg6[%c40_502, %c16_503], %193 {strides = array<i32>} : memref<64x48xf32, #tpu.memory_space<vmem>>, vector<8x4xf32>,
    %c0_504 = arith.constant 0 : index
    %c1_505 = arith.constant 1 : index
    %c5_506 = arith.constant 5 : index
    %c1_507 = arith.constant 1 : index
    %c0_508 = arith.constant 0 : index
    %c0_509 = arith.constant 0 : index
    %195 = vector.load %arg2[%c0_504, %c1_505, %c5_506, %c1_507, %c0_508, %c0_509] : memref<1x3x8x4x8x4xf32, #tpu.memory_space<vmem>>, vector<1x1x1x1x8x4xf32>
    %196 = vector.shape_cast %195 : vector<1x1x1x1x8x4xf32> to vector<8x4xf32>
    %c40_510 = arith.constant 40 : index
    %c20_511 = arith.constant 20 : index
    %197 = vector.load %arg6[%c40_510, %c20_511] : memref<64x48xf32, #tpu.memory_space<vmem>>, vector<8x4xf32>
    tpu.vector_store %arg6[%c40_510, %c20_511], %196 {strides = array<i32>} : memref<64x48xf32, #tpu.memory_space<vmem>>, vector<8x4xf32>,
    %c0_512 = arith.constant 0 : index
    %c1_513 = arith.constant 1 : index
    %c5_514 = arith.constant 5 : index
    %c2_515 = arith.constant 2 : index
    %c0_516 = arith.constant 0 : index
    %c0_517 = arith.constant 0 : index
    %198 = vector.load %arg2[%c0_512, %c1_513, %c5_514, %c2_515, %c0_516, %c0_517] : memref<1x3x8x4x8x4xf32, #tpu.memory_space<vmem>>, vector<1x1x1x1x8x4xf32>
    %199 = vector.shape_cast %198 : vector<1x1x1x1x8x4xf32> to vector<8x4xf32>
    %c40_518 = arith.constant 40 : index
    %c24_519 = arith.constant 24 : index
    %200 = vector.load %arg6[%c40_518, %c24_519] : memref<64x48xf32, #tpu.memory_space<vmem>>, vector<8x4xf32>
    tpu.vector_store %arg6[%c40_518, %c24_519], %199 {strides = array<i32>} : memref<64x48xf32, #tpu.memory_space<vmem>>, vector<8x4xf32>,
    %c0_520 = arith.constant 0 : index
    %c1_521 = arith.constant 1 : index
    %c5_522 = arith.constant 5 : index
    %c3_523 = arith.constant 3 : index
    %c0_524 = arith.constant 0 : index
    %c0_525 = arith.constant 0 : index
    %201 = vector.load %arg2[%c0_520, %c1_521, %c5_522, %c3_523, %c0_524, %c0_525] : memref<1x3x8x4x8x4xf32, #tpu.memory_space<vmem>>, vector<1x1x1x1x8x4xf32>
    %202 = vector.shape_cast %201 : vector<1x1x1x1x8x4xf32> to vector<8x4xf32>
    %c40_526 = arith.constant 40 : index
    %c28_527 = arith.constant 28 : index
    %203 = vector.load %arg6[%c40_526, %c28_527] : memref<64x48xf32, #tpu.memory_space<vmem>>, vector<8x4xf32>
    tpu.vector_store %arg6[%c40_526, %c28_527], %202 {strides = array<i32>} : memref<64x48xf32, #tpu.memory_space<vmem>>, vector<8x4xf32>,
    %c0_528 = arith.constant 0 : index
    %c2_529 = arith.constant 2 : index
    %c5_530 = arith.constant 5 : index
    %c0_531 = arith.constant 0 : index
    %c0_532 = arith.constant 0 : index
    %c0_533 = arith.constant 0 : index
    %204 = vector.load %arg2[%c0_528, %c2_529, %c5_530, %c0_531, %c0_532, %c0_533] : memref<1x3x8x4x8x4xf32, #tpu.memory_space<vmem>>, vector<1x1x1x1x8x4xf32>
    %205 = vector.shape_cast %204 : vector<1x1x1x1x8x4xf32> to vector<8x4xf32>
    %c40_534 = arith.constant 40 : index
    %c32_535 = arith.constant 32 : index
    %206 = vector.load %arg6[%c40_534, %c32_535] : memref<64x48xf32, #tpu.memory_space<vmem>>, vector<8x4xf32>
    tpu.vector_store %arg6[%c40_534, %c32_535], %205 {strides = array<i32>} : memref<64x48xf32, #tpu.memory_space<vmem>>, vector<8x4xf32>,
    %c0_536 = arith.constant 0 : index
    %c2_537 = arith.constant 2 : index
    %c5_538 = arith.constant 5 : index
    %c1_539 = arith.constant 1 : index
    %c0_540 = arith.constant 0 : index
    %c0_541 = arith.constant 0 : index
    %207 = vector.load %arg2[%c0_536, %c2_537, %c5_538, %c1_539, %c0_540, %c0_541] : memref<1x3x8x4x8x4xf32, #tpu.memory_space<vmem>>, vector<1x1x1x1x8x4xf32>
    %208 = vector.shape_cast %207 : vector<1x1x1x1x8x4xf32> to vector<8x4xf32>
    %c40_542 = arith.constant 40 : index
    %c36_543 = arith.constant 36 : index
    %209 = vector.load %arg6[%c40_542, %c36_543] : memref<64x48xf32, #tpu.memory_space<vmem>>, vector<8x4xf32>
    tpu.vector_store %arg6[%c40_542, %c36_543], %208 {strides = array<i32>} : memref<64x48xf32, #tpu.memory_space<vmem>>, vector<8x4xf32>,
    %c0_544 = arith.constant 0 : index
    %c2_545 = arith.constant 2 : index
    %c5_546 = arith.constant 5 : index
    %c2_547 = arith.constant 2 : index
    %c0_548 = arith.constant 0 : index
    %c0_549 = arith.constant 0 : index
    %210 = vector.load %arg2[%c0_544, %c2_545, %c5_546, %c2_547, %c0_548, %c0_549] : memref<1x3x8x4x8x4xf32, #tpu.memory_space<vmem>>, vector<1x1x1x1x8x4xf32>
    %211 = vector.shape_cast %210 : vector<1x1x1x1x8x4xf32> to vector<8x4xf32>
    %c40_550 = arith.constant 40 : index
    %c40_551 = arith.constant 40 : index
    %212 = vector.load %arg6[%c40_550, %c40_551] : memref<64x48xf32, #tpu.memory_space<vmem>>, vector<8x4xf32>
    tpu.vector_store %arg6[%c40_550, %c40_551], %211 {strides = array<i32>} : memref<64x48xf32, #tpu.memory_space<vmem>>, vector<8x4xf32>,
    %c0_552 = arith.constant 0 : index
    %c2_553 = arith.constant 2 : index
    %c5_554 = arith.constant 5 : index
    %c3_555 = arith.constant 3 : index
    %c0_556 = arith.constant 0 : index
    %c0_557 = arith.constant 0 : index
    %213 = vector.load %arg2[%c0_552, %c2_553, %c5_554, %c3_555, %c0_556, %c0_557] : memref<1x3x8x4x8x4xf32, #tpu.memory_space<vmem>>, vector<1x1x1x1x8x4xf32>
    %214 = vector.shape_cast %213 : vector<1x1x1x1x8x4xf32> to vector<8x4xf32>
    %c40_558 = arith.constant 40 : index
    %c44_559 = arith.constant 44 : index
    %215 = vector.load %arg6[%c40_558, %c44_559] : memref<64x48xf32, #tpu.memory_space<vmem>>, vector<8x4xf32>
    tpu.vector_store %arg6[%c40_558, %c44_559], %214 {strides = array<i32>} : memref<64x48xf32, #tpu.memory_space<vmem>>, vector<8x4xf32>,
    %c0_560 = arith.constant 0 : index
    %c0_561 = arith.constant 0 : index
    %c6 = arith.constant 6 : index
    %c0_562 = arith.constant 0 : index
    %c0_563 = arith.constant 0 : index
    %c0_564 = arith.constant 0 : index
    %216 = vector.load %arg2[%c0_560, %c0_561, %c6, %c0_562, %c0_563, %c0_564] : memref<1x3x8x4x8x4xf32, #tpu.memory_space<vmem>>, vector<1x1x1x1x8x4xf32>
    %217 = vector.shape_cast %216 : vector<1x1x1x1x8x4xf32> to vector<8x4xf32>
    %c48 = arith.constant 48 : index
    %c0_565 = arith.constant 0 : index
    %218 = vector.load %arg6[%c48, %c0_565] : memref<64x48xf32, #tpu.memory_space<vmem>>, vector<8x4xf32>
    tpu.vector_store %arg6[%c48, %c0_565], %217 {strides = array<i32>} : memref<64x48xf32, #tpu.memory_space<vmem>>, vector<8x4xf32>,
    %c0_566 = arith.constant 0 : index
    %c0_567 = arith.constant 0 : index
    %c6_568 = arith.constant 6 : index
    %c1_569 = arith.constant 1 : index
    %c0_570 = arith.constant 0 : index
    %c0_571 = arith.constant 0 : index
    %219 = vector.load %arg2[%c0_566, %c0_567, %c6_568, %c1_569, %c0_570, %c0_571] : memref<1x3x8x4x8x4xf32, #tpu.memory_space<vmem>>, vector<1x1x1x1x8x4xf32>
    %220 = vector.shape_cast %219 : vector<1x1x1x1x8x4xf32> to vector<8x4xf32>
    %c48_572 = arith.constant 48 : index
    %c4_573 = arith.constant 4 : index
    %221 = vector.load %arg6[%c48_572, %c4_573] : memref<64x48xf32, #tpu.memory_space<vmem>>, vector<8x4xf32>
    tpu.vector_store %arg6[%c48_572, %c4_573], %220 {strides = array<i32>} : memref<64x48xf32, #tpu.memory_space<vmem>>, vector<8x4xf32>,
    %c0_574 = arith.constant 0 : index
    %c0_575 = arith.constant 0 : index
    %c6_576 = arith.constant 6 : index
    %c2_577 = arith.constant 2 : index
    %c0_578 = arith.constant 0 : index
    %c0_579 = arith.constant 0 : index
    %222 = vector.load %arg2[%c0_574, %c0_575, %c6_576, %c2_577, %c0_578, %c0_579] : memref<1x3x8x4x8x4xf32, #tpu.memory_space<vmem>>, vector<1x1x1x1x8x4xf32>
    %223 = vector.shape_cast %222 : vector<1x1x1x1x8x4xf32> to vector<8x4xf32>
    %c48_580 = arith.constant 48 : index
    %c8_581 = arith.constant 8 : index
    %224 = vector.load %arg6[%c48_580, %c8_581] : memref<64x48xf32, #tpu.memory_space<vmem>>, vector<8x4xf32>
    tpu.vector_store %arg6[%c48_580, %c8_581], %223 {strides = array<i32>} : memref<64x48xf32, #tpu.memory_space<vmem>>, vector<8x4xf32>,
    %c0_582 = arith.constant 0 : index
    %c0_583 = arith.constant 0 : index
    %c6_584 = arith.constant 6 : index
    %c3_585 = arith.constant 3 : index
    %c0_586 = arith.constant 0 : index
    %c0_587 = arith.constant 0 : index
    %225 = vector.load %arg2[%c0_582, %c0_583, %c6_584, %c3_585, %c0_586, %c0_587] : memref<1x3x8x4x8x4xf32, #tpu.memory_space<vmem>>, vector<1x1x1x1x8x4xf32>
    %226 = vector.shape_cast %225 : vector<1x1x1x1x8x4xf32> to vector<8x4xf32>
    %c48_588 = arith.constant 48 : index
    %c12_589 = arith.constant 12 : index
    %227 = vector.load %arg6[%c48_588, %c12_589] : memref<64x48xf32, #tpu.memory_space<vmem>>, vector<8x4xf32>
    tpu.vector_store %arg6[%c48_588, %c12_589], %226 {strides = array<i32>} : memref<64x48xf32, #tpu.memory_space<vmem>>, vector<8x4xf32>,
    %c0_590 = arith.constant 0 : index
    %c1_591 = arith.constant 1 : index
    %c6_592 = arith.constant 6 : index
    %c0_593 = arith.constant 0 : index
    %c0_594 = arith.constant 0 : index
    %c0_595 = arith.constant 0 : index
    %228 = vector.load %arg2[%c0_590, %c1_591, %c6_592, %c0_593, %c0_594, %c0_595] : memref<1x3x8x4x8x4xf32, #tpu.memory_space<vmem>>, vector<1x1x1x1x8x4xf32>
    %229 = vector.shape_cast %228 : vector<1x1x1x1x8x4xf32> to vector<8x4xf32>
    %c48_596 = arith.constant 48 : index
    %c16_597 = arith.constant 16 : index
    %230 = vector.load %arg6[%c48_596, %c16_597] : memref<64x48xf32, #tpu.memory_space<vmem>>, vector<8x4xf32>
    tpu.vector_store %arg6[%c48_596, %c16_597], %229 {strides = array<i32>} : memref<64x48xf32, #tpu.memory_space<vmem>>, vector<8x4xf32>,
    %c0_598 = arith.constant 0 : index
    %c1_599 = arith.constant 1 : index
    %c6_600 = arith.constant 6 : index
    %c1_601 = arith.constant 1 : index
    %c0_602 = arith.constant 0 : index
    %c0_603 = arith.constant 0 : index
    %231 = vector.load %arg2[%c0_598, %c1_599, %c6_600, %c1_601, %c0_602, %c0_603] : memref<1x3x8x4x8x4xf32, #tpu.memory_space<vmem>>, vector<1x1x1x1x8x4xf32>
    %232 = vector.shape_cast %231 : vector<1x1x1x1x8x4xf32> to vector<8x4xf32>
    %c48_604 = arith.constant 48 : index
    %c20_605 = arith.constant 20 : index
    %233 = vector.load %arg6[%c48_604, %c20_605] : memref<64x48xf32, #tpu.memory_space<vmem>>, vector<8x4xf32>
    tpu.vector_store %arg6[%c48_604, %c20_605], %232 {strides = array<i32>} : memref<64x48xf32, #tpu.memory_space<vmem>>, vector<8x4xf32>,
    %c0_606 = arith.constant 0 : index
    %c1_607 = arith.constant 1 : index
    %c6_608 = arith.constant 6 : index
    %c2_609 = arith.constant 2 : index
    %c0_610 = arith.constant 0 : index
    %c0_611 = arith.constant 0 : index
    %234 = vector.load %arg2[%c0_606, %c1_607, %c6_608, %c2_609, %c0_610, %c0_611] : memref<1x3x8x4x8x4xf32, #tpu.memory_space<vmem>>, vector<1x1x1x1x8x4xf32>
    %235 = vector.shape_cast %234 : vector<1x1x1x1x8x4xf32> to vector<8x4xf32>
    %c48_612 = arith.constant 48 : index
    %c24_613 = arith.constant 24 : index
    %236 = vector.load %arg6[%c48_612, %c24_613] : memref<64x48xf32, #tpu.memory_space<vmem>>, vector<8x4xf32>
    tpu.vector_store %arg6[%c48_612, %c24_613], %235 {strides = array<i32>} : memref<64x48xf32, #tpu.memory_space<vmem>>, vector<8x4xf32>,
    %c0_614 = arith.constant 0 : index
    %c1_615 = arith.constant 1 : index
    %c6_616 = arith.constant 6 : index
    %c3_617 = arith.constant 3 : index
    %c0_618 = arith.constant 0 : index
    %c0_619 = arith.constant 0 : index
    %237 = vector.load %arg2[%c0_614, %c1_615, %c6_616, %c3_617, %c0_618, %c0_619] : memref<1x3x8x4x8x4xf32, #tpu.memory_space<vmem>>, vector<1x1x1x1x8x4xf32>
    %238 = vector.shape_cast %237 : vector<1x1x1x1x8x4xf32> to vector<8x4xf32>
    %c48_620 = arith.constant 48 : index
    %c28_621 = arith.constant 28 : index
    %239 = vector.load %arg6[%c48_620, %c28_621] : memref<64x48xf32, #tpu.memory_space<vmem>>, vector<8x4xf32>
    tpu.vector_store %arg6[%c48_620, %c28_621], %238 {strides = array<i32>} : memref<64x48xf32, #tpu.memory_space<vmem>>, vector<8x4xf32>,
    %c0_622 = arith.constant 0 : index
    %c2_623 = arith.constant 2 : index
    %c6_624 = arith.constant 6 : index
    %c0_625 = arith.constant 0 : index
    %c0_626 = arith.constant 0 : index
    %c0_627 = arith.constant 0 : index
    %240 = vector.load %arg2[%c0_622, %c2_623, %c6_624, %c0_625, %c0_626, %c0_627] : memref<1x3x8x4x8x4xf32, #tpu.memory_space<vmem>>, vector<1x1x1x1x8x4xf32>
    %241 = vector.shape_cast %240 : vector<1x1x1x1x8x4xf32> to vector<8x4xf32>
    %c48_628 = arith.constant 48 : index
    %c32_629 = arith.constant 32 : index
    %242 = vector.load %arg6[%c48_628, %c32_629] : memref<64x48xf32, #tpu.memory_space<vmem>>, vector<8x4xf32>
    tpu.vector_store %arg6[%c48_628, %c32_629], %241 {strides = array<i32>} : memref<64x48xf32, #tpu.memory_space<vmem>>, vector<8x4xf32>,
    %c0_630 = arith.constant 0 : index
    %c2_631 = arith.constant 2 : index
    %c6_632 = arith.constant 6 : index
    %c1_633 = arith.constant 1 : index
    %c0_634 = arith.constant 0 : index
    %c0_635 = arith.constant 0 : index
    %243 = vector.load %arg2[%c0_630, %c2_631, %c6_632, %c1_633, %c0_634, %c0_635] : memref<1x3x8x4x8x4xf32, #tpu.memory_space<vmem>>, vector<1x1x1x1x8x4xf32>
    %244 = vector.shape_cast %243 : vector<1x1x1x1x8x4xf32> to vector<8x4xf32>
    %c48_636 = arith.constant 48 : index
    %c36_637 = arith.constant 36 : index
    %245 = vector.load %arg6[%c48_636, %c36_637] : memref<64x48xf32, #tpu.memory_space<vmem>>, vector<8x4xf32>
    tpu.vector_store %arg6[%c48_636, %c36_637], %244 {strides = array<i32>} : memref<64x48xf32, #tpu.memory_space<vmem>>, vector<8x4xf32>,
    %c0_638 = arith.constant 0 : index
    %c2_639 = arith.constant 2 : index
    %c6_640 = arith.constant 6 : index
    %c2_641 = arith.constant 2 : index
    %c0_642 = arith.constant 0 : index
    %c0_643 = arith.constant 0 : index
    %246 = vector.load %arg2[%c0_638, %c2_639, %c6_640, %c2_641, %c0_642, %c0_643] : memref<1x3x8x4x8x4xf32, #tpu.memory_space<vmem>>, vector<1x1x1x1x8x4xf32>
    %247 = vector.shape_cast %246 : vector<1x1x1x1x8x4xf32> to vector<8x4xf32>
    %c48_644 = arith.constant 48 : index
    %c40_645 = arith.constant 40 : index
    %248 = vector.load %arg6[%c48_644, %c40_645] : memref<64x48xf32, #tpu.memory_space<vmem>>, vector<8x4xf32>
    tpu.vector_store %arg6[%c48_644, %c40_645], %247 {strides = array<i32>} : memref<64x48xf32, #tpu.memory_space<vmem>>, vector<8x4xf32>,
    %c0_646 = arith.constant 0 : index
    %c2_647 = arith.constant 2 : index
    %c6_648 = arith.constant 6 : index
    %c3_649 = arith.constant 3 : index
    %c0_650 = arith.constant 0 : index
    %c0_651 = arith.constant 0 : index
    %249 = vector.load %arg2[%c0_646, %c2_647, %c6_648, %c3_649, %c0_650, %c0_651] : memref<1x3x8x4x8x4xf32, #tpu.memory_space<vmem>>, vector<1x1x1x1x8x4xf32>
    %250 = vector.shape_cast %249 : vector<1x1x1x1x8x4xf32> to vector<8x4xf32>
    %c48_652 = arith.constant 48 : index
    %c44_653 = arith.constant 44 : index
    %251 = vector.load %arg6[%c48_652, %c44_653] : memref<64x48xf32, #tpu.memory_space<vmem>>, vector<8x4xf32>
    tpu.vector_store %arg6[%c48_652, %c44_653], %250 {strides = array<i32>} : memref<64x48xf32, #tpu.memory_space<vmem>>, vector<8x4xf32>,
    %c0_654 = arith.constant 0 : index
    %c0_655 = arith.constant 0 : index
    %c7 = arith.constant 7 : index
    %c0_656 = arith.constant 0 : index
    %c0_657 = arith.constant 0 : index
    %c0_658 = arith.constant 0 : index
    %252 = vector.load %arg2[%c0_654, %c0_655, %c7, %c0_656, %c0_657, %c0_658] : memref<1x3x8x4x8x4xf32, #tpu.memory_space<vmem>>, vector<1x1x1x1x8x4xf32>
    %253 = vector.shape_cast %252 : vector<1x1x1x1x8x4xf32> to vector<8x4xf32>
    %c56 = arith.constant 56 : index
    %c0_659 = arith.constant 0 : index
    %254 = vector.load %arg6[%c56, %c0_659] : memref<64x48xf32, #tpu.memory_space<vmem>>, vector<8x4xf32>
    tpu.vector_store %arg6[%c56, %c0_659], %253 {strides = array<i32>} : memref<64x48xf32, #tpu.memory_space<vmem>>, vector<8x4xf32>,
    %c0_660 = arith.constant 0 : index
    %c0_661 = arith.constant 0 : index
    %c7_662 = arith.constant 7 : index
    %c1_663 = arith.constant 1 : index
    %c0_664 = arith.constant 0 : index
    %c0_665 = arith.constant 0 : index
    %255 = vector.load %arg2[%c0_660, %c0_661, %c7_662, %c1_663, %c0_664, %c0_665] : memref<1x3x8x4x8x4xf32, #tpu.memory_space<vmem>>, vector<1x1x1x1x8x4xf32>
    %256 = vector.shape_cast %255 : vector<1x1x1x1x8x4xf32> to vector<8x4xf32>
    %c56_666 = arith.constant 56 : index
    %c4_667 = arith.constant 4 : index
    %257 = vector.load %arg6[%c56_666, %c4_667] : memref<64x48xf32, #tpu.memory_space<vmem>>, vector<8x4xf32>
    tpu.vector_store %arg6[%c56_666, %c4_667], %256 {strides = array<i32>} : memref<64x48xf32, #tpu.memory_space<vmem>>, vector<8x4xf32>,
    %c0_668 = arith.constant 0 : index
    %c0_669 = arith.constant 0 : index
    %c7_670 = arith.constant 7 : index
    %c2_671 = arith.constant 2 : index
    %c0_672 = arith.constant 0 : index
    %c0_673 = arith.constant 0 : index
    %258 = vector.load %arg2[%c0_668, %c0_669, %c7_670, %c2_671, %c0_672, %c0_673] : memref<1x3x8x4x8x4xf32, #tpu.memory_space<vmem>>, vector<1x1x1x1x8x4xf32>
    %259 = vector.shape_cast %258 : vector<1x1x1x1x8x4xf32> to vector<8x4xf32>
    %c56_674 = arith.constant 56 : index
    %c8_675 = arith.constant 8 : index
    %260 = vector.load %arg6[%c56_674, %c8_675] : memref<64x48xf32, #tpu.memory_space<vmem>>, vector<8x4xf32>
    tpu.vector_store %arg6[%c56_674, %c8_675], %259 {strides = array<i32>} : memref<64x48xf32, #tpu.memory_space<vmem>>, vector<8x4xf32>,
    %c0_676 = arith.constant 0 : index
    %c0_677 = arith.constant 0 : index
    %c7_678 = arith.constant 7 : index
    %c3_679 = arith.constant 3 : index
    %c0_680 = arith.constant 0 : index
    %c0_681 = arith.constant 0 : index
    %261 = vector.load %arg2[%c0_676, %c0_677, %c7_678, %c3_679, %c0_680, %c0_681] : memref<1x3x8x4x8x4xf32, #tpu.memory_space<vmem>>, vector<1x1x1x1x8x4xf32>
    %262 = vector.shape_cast %261 : vector<1x1x1x1x8x4xf32> to vector<8x4xf32>
    %c56_682 = arith.constant 56 : index
    %c12_683 = arith.constant 12 : index
    %263 = vector.load %arg6[%c56_682, %c12_683] : memref<64x48xf32, #tpu.memory_space<vmem>>, vector<8x4xf32>
    tpu.vector_store %arg6[%c56_682, %c12_683], %262 {strides = array<i32>} : memref<64x48xf32, #tpu.memory_space<vmem>>, vector<8x4xf32>,
    %c0_684 = arith.constant 0 : index
    %c1_685 = arith.constant 1 : index
    %c7_686 = arith.constant 7 : index
    %c0_687 = arith.constant 0 : index
    %c0_688 = arith.constant 0 : index
    %c0_689 = arith.constant 0 : index
    %264 = vector.load %arg2[%c0_684, %c1_685, %c7_686, %c0_687, %c0_688, %c0_689] : memref<1x3x8x4x8x4xf32, #tpu.memory_space<vmem>>, vector<1x1x1x1x8x4xf32>
    %265 = vector.shape_cast %264 : vector<1x1x1x1x8x4xf32> to vector<8x4xf32>
    %c56_690 = arith.constant 56 : index
    %c16_691 = arith.constant 16 : index
    %266 = vector.load %arg6[%c56_690, %c16_691] : memref<64x48xf32, #tpu.memory_space<vmem>>, vector<8x4xf32>
    tpu.vector_store %arg6[%c56_690, %c16_691], %265 {strides = array<i32>} : memref<64x48xf32, #tpu.memory_space<vmem>>, vector<8x4xf32>,
    %c0_692 = arith.constant 0 : index
    %c1_693 = arith.constant 1 : index
    %c7_694 = arith.constant 7 : index
    %c1_695 = arith.constant 1 : index
    %c0_696 = arith.constant 0 : index
    %c0_697 = arith.constant 0 : index
    %267 = vector.load %arg2[%c0_692, %c1_693, %c7_694, %c1_695, %c0_696, %c0_697] : memref<1x3x8x4x8x4xf32, #tpu.memory_space<vmem>>, vector<1x1x1x1x8x4xf32>
    %268 = vector.shape_cast %267 : vector<1x1x1x1x8x4xf32> to vector<8x4xf32>
    %c56_698 = arith.constant 56 : index
    %c20_699 = arith.constant 20 : index
    %269 = vector.load %arg6[%c56_698, %c20_699] : memref<64x48xf32, #tpu.memory_space<vmem>>, vector<8x4xf32>
    tpu.vector_store %arg6[%c56_698, %c20_699], %268 {strides = array<i32>} : memref<64x48xf32, #tpu.memory_space<vmem>>, vector<8x4xf32>,
    %c0_700 = arith.constant 0 : index
    %c1_701 = arith.constant 1 : index
    %c7_702 = arith.constant 7 : index
    %c2_703 = arith.constant 2 : index
    %c0_704 = arith.constant 0 : index
    %c0_705 = arith.constant 0 : index
    %270 = vector.load %arg2[%c0_700, %c1_701, %c7_702, %c2_703, %c0_704, %c0_705] : memref<1x3x8x4x8x4xf32, #tpu.memory_space<vmem>>, vector<1x1x1x1x8x4xf32>
    %271 = vector.shape_cast %270 : vector<1x1x1x1x8x4xf32> to vector<8x4xf32>
    %c56_706 = arith.constant 56 : index
    %c24_707 = arith.constant 24 : index
    %272 = vector.load %arg6[%c56_706, %c24_707] : memref<64x48xf32, #tpu.memory_space<vmem>>, vector<8x4xf32>
    tpu.vector_store %arg6[%c56_706, %c24_707], %271 {strides = array<i32>} : memref<64x48xf32, #tpu.memory_space<vmem>>, vector<8x4xf32>,
    %c0_708 = arith.constant 0 : index
    %c1_709 = arith.constant 1 : index
    %c7_710 = arith.constant 7 : index
    %c3_711 = arith.constant 3 : index
    %c0_712 = arith.constant 0 : index
    %c0_713 = arith.constant 0 : index
    %273 = vector.load %arg2[%c0_708, %c1_709, %c7_710, %c3_711, %c0_712, %c0_713] : memref<1x3x8x4x8x4xf32, #tpu.memory_space<vmem>>, vector<1x1x1x1x8x4xf32>
    %274 = vector.shape_cast %273 : vector<1x1x1x1x8x4xf32> to vector<8x4xf32>
    %c56_714 = arith.constant 56 : index
    %c28_715 = arith.constant 28 : index
    %275 = vector.load %arg6[%c56_714, %c28_715] : memref<64x48xf32, #tpu.memory_space<vmem>>, vector<8x4xf32>
    tpu.vector_store %arg6[%c56_714, %c28_715], %274 {strides = array<i32>} : memref<64x48xf32, #tpu.memory_space<vmem>>, vector<8x4xf32>,
    %c0_716 = arith.constant 0 : index
    %c2_717 = arith.constant 2 : index
    %c7_718 = arith.constant 7 : index
    %c0_719 = arith.constant 0 : index
    %c0_720 = arith.constant 0 : index
    %c0_721 = arith.constant 0 : index
    %276 = vector.load %arg2[%c0_716, %c2_717, %c7_718, %c0_719, %c0_720, %c0_721] : memref<1x3x8x4x8x4xf32, #tpu.memory_space<vmem>>, vector<1x1x1x1x8x4xf32>
    %277 = vector.shape_cast %276 : vector<1x1x1x1x8x4xf32> to vector<8x4xf32>
    %c56_722 = arith.constant 56 : index
    %c32_723 = arith.constant 32 : index
    %278 = vector.load %arg6[%c56_722, %c32_723] : memref<64x48xf32, #tpu.memory_space<vmem>>, vector<8x4xf32>
    tpu.vector_store %arg6[%c56_722, %c32_723], %277 {strides = array<i32>} : memref<64x48xf32, #tpu.memory_space<vmem>>, vector<8x4xf32>,
    %c0_724 = arith.constant 0 : index
    %c2_725 = arith.constant 2 : index
    %c7_726 = arith.constant 7 : index
    %c1_727 = arith.constant 1 : index
    %c0_728 = arith.constant 0 : index
    %c0_729 = arith.constant 0 : index
    %279 = vector.load %arg2[%c0_724, %c2_725, %c7_726, %c1_727, %c0_728, %c0_729] : memref<1x3x8x4x8x4xf32, #tpu.memory_space<vmem>>, vector<1x1x1x1x8x4xf32>
    %280 = vector.shape_cast %279 : vector<1x1x1x1x8x4xf32> to vector<8x4xf32>
    %c56_730 = arith.constant 56 : index
    %c36_731 = arith.constant 36 : index
    %281 = vector.load %arg6[%c56_730, %c36_731] : memref<64x48xf32, #tpu.memory_space<vmem>>, vector<8x4xf32>
    tpu.vector_store %arg6[%c56_730, %c36_731], %280 {strides = array<i32>} : memref<64x48xf32, #tpu.memory_space<vmem>>, vector<8x4xf32>,
    %c0_732 = arith.constant 0 : index
    %c2_733 = arith.constant 2 : index
    %c7_734 = arith.constant 7 : index
    %c2_735 = arith.constant 2 : index
    %c0_736 = arith.constant 0 : index
    %c0_737 = arith.constant 0 : index
    %282 = vector.load %arg2[%c0_732, %c2_733, %c7_734, %c2_735, %c0_736, %c0_737] : memref<1x3x8x4x8x4xf32, #tpu.memory_space<vmem>>, vector<1x1x1x1x8x4xf32>
    %283 = vector.shape_cast %282 : vector<1x1x1x1x8x4xf32> to vector<8x4xf32>
    %c56_738 = arith.constant 56 : index
    %c40_739 = arith.constant 40 : index
    %284 = vector.load %arg6[%c56_738, %c40_739] : memref<64x48xf32, #tpu.memory_space<vmem>>, vector<8x4xf32>
    tpu.vector_store %arg6[%c56_738, %c40_739], %283 {strides = array<i32>} : memref<64x48xf32, #tpu.memory_space<vmem>>, vector<8x4xf32>,
    %c0_740 = arith.constant 0 : index
    %c2_741 = arith.constant 2 : index
    %c7_742 = arith.constant 7 : index
    %c3_743 = arith.constant 3 : index
    %c0_744 = arith.constant 0 : index
    %c0_745 = arith.constant 0 : index
    %285 = vector.load %arg2[%c0_740, %c2_741, %c7_742, %c3_743, %c0_744, %c0_745] : memref<1x3x8x4x8x4xf32, #tpu.memory_space<vmem>>, vector<1x1x1x1x8x4xf32>
    %286 = vector.shape_cast %285 : vector<1x1x1x1x8x4xf32> to vector<8x4xf32>
    %c56_746 = arith.constant 56 : index
    %c44_747 = arith.constant 44 : index
    %287 = vector.load %arg6[%c56_746, %c44_747] : memref<64x48xf32, #tpu.memory_space<vmem>>, vector<8x4xf32>
    tpu.vector_store %arg6[%c56_746, %c44_747], %286 {strides = array<i32>} : memref<64x48xf32, #tpu.memory_space<vmem>>, vector<8x4xf32>,
    %c0_748 = arith.constant 0 : index
    %c0_749 = arith.constant 0 : index
    %288 = vector.load %arg6[%c0_748, %c0_749] : memref<64x48xf32, #tpu.memory_space<vmem>>, vector<64x48xf32>
    %c0_750 = arith.constant 0 : index
    %c0_751 = arith.constant 0 : index
    %289 = vector.load %arg3[%c0_750, %c0_751] : memref<48x128xf32, #tpu.memory_space<vmem>>, vector<48x128xf32>
    %cst = arith.constant dense<0.000000e+00> : vector<64x128xf32>
    %290 = tpu.matmul %288, %289, %cst {dimension_numbers = #tpu.dot_dimension_numbers<[1], [0], [0], [1], [0, 0, 1, 1], [], []>} : vector<64x48xf32>, vector<48x128xf32>, vector<64x128xf32> -> vector<64x128xf32>
    %c0_752 = arith.constant 0 : index
    %c0_753 = arith.constant 0 : index
    %291 = vector.load %arg4[%c0_752, %c0_753] : memref<8x128xf32, #tpu.memory_space<vmem>>, vector<1x128xf32>
    %292 = vector.broadcast %291 : vector<1x128xf32> to vector<64x128xf32>
    %293 = arith.addf %290, %292 : vector<64x128xf32>
    %cst_754 = arith.constant dense<0.000000e+00> : vector<64xf32>
    %294 = vector.multi_reduction <add>, %293, %cst_754 [1] : vector<64x128xf32> to vector<64xf32>
    %295 = vector.shape_cast %294 : vector<64xf32> to vector<64x1xf32>
    %cst_755 = arith.constant 3.125000e-02 : f32
    %296 = vector.broadcast %cst_755 : f32 to vector<64x1xf32>
    %297 = arith.mulf %295, %296 : vector<64x1xf32>
    %298 = arith.mulf %293, %293 : vector<64x128xf32>
    %cst_756 = arith.constant dense<0.000000e+00> : vector<64xf32>
    %299 = vector.multi_reduction <add>, %298, %cst_756 [1] : vector<64x128xf32> to vector<64xf32>
    %300 = vector.shape_cast %299 : vector<64xf32> to vector<64x1xf32>
    %cst_757 = arith.constant 3.125000e-02 : f32
    %301 = vector.broadcast %cst_757 : f32 to vector<64x1xf32>
    %302 = arith.mulf %300, %301 : vector<64x1xf32>
    %303 = vector.broadcast %297 : vector<64x1xf32> to vector<64x128xf32>
    %304 = arith.subf %293, %303 : vector<64x128xf32>
    %305 = arith.mulf %297, %297 : vector<64x1xf32>
    %306 = arith.subf %302, %305 : vector<64x1xf32>
    %cst_758 = arith.constant 9.99999974E-6 : f32
    %307 = vector.broadcast %cst_758 : f32 to vector<64x1xf32>
    %308 = arith.addf %306, %307 : vector<64x1xf32>
    %309 = math.rsqrt %308 : vector<64x1xf32>
    %310 = vector.broadcast %309 : vector<64x1xf32> to vector<64x128xf32>
    %311 = arith.mulf %304, %310 : vector<64x128xf32>
    %c1_759 = arith.constant 1 : index
    %c0_760 = arith.constant 0 : index
    %312 = vector.load %arg4[%c1_759, %c0_760] : memref<8x128xf32, #tpu.memory_space<vmem>>, vector<1x128xf32>
    %313 = vector.broadcast %312 : vector<1x128xf32> to vector<64x128xf32>
    %314 = arith.mulf %311, %313 : vector<64x128xf32>
    %c2_761 = arith.constant 2 : index
    %c0_762 = arith.constant 0 : index
    %315 = vector.load %arg4[%c2_761, %c0_762] : memref<8x128xf32, #tpu.memory_space<vmem>>, vector<1x128xf32>
    %316 = vector.broadcast %315 : vector<1x128xf32> to vector<64x128xf32>
    %317 = arith.addf %314, %316 : vector<64x128xf32>
    %c0_763 = arith.constant 0 : index
    %c0_764 = arith.constant 0 : index
    %c0_765 = arith.constant 0 : index
    %318 = vector.load %arg5[%c0_763, %c0_764, %c0_765] : memref<1x64x128xf32, #tpu.memory_space<vmem>>, vector<1x64x128xf32>
    %319 = vector.shape_cast %318 : vector<1x64x128xf32> to vector<64x128xf32>
    %320 = vector.shape_cast %317 : vector<64x128xf32> to vector<1x64x128xf32>
    tpu.vector_store %arg5[%c0_763, %c0_764, %c0_765], %320 {strides = array<i32>} : memref<1x64x128xf32, #tpu.memory_space<vmem>>, vector<1x64x128xf32>,
    return
  }
  func.func @transform_0(%arg0: i32, %arg1: i32) -> (i32, i32, i32, i32, i32, i32) {
    %c0_i32 = arith.constant 0 : i32
    %c0_i32_0 = arith.constant 0 : i32
    %c0_i32_1 = arith.constant 0 : i32
    %c0_i32_2 = arith.constant 0 : i32
    %c0_i32_3 = arith.constant 0 : i32
    return %arg0, %c0_i32, %arg1, %c0_i32_0, %c0_i32_1, %c0_i32_2 : i32, i32, i32, i32, i32, i32
  }
  func.func @transform_1(%arg0: i32, %arg1: i32) -> (i32, i32) {
    %c0_i32 = arith.constant 0 : i32
    %c0_i32_0 = arith.constant 0 : i32
    %c0_i32_1 = arith.constant 0 : i32
    return %c0_i32, %c0_i32_0 : i32, i32
  }
  func.func @transform_2(%arg0: i32, %arg1: i32) -> (i32, i32) {
    %c0_i32 = arith.constant 0 : i32
    %c0_i32_0 = arith.constant 0 : i32
    %c0_i32_1 = arith.constant 0 : i32
    return %c0_i32, %c0_i32_0 : i32, i32
  }
  func.func @transform_3(%arg0: i32, %arg1: i32) -> (i32, i32, i32) {
    %c0_i32 = arith.constant 0 : i32
    %c0_i32_0 = arith.constant 0 : i32
    return %arg0, %arg1, %c0_i32 : i32, i32, i32
  }
}

</mosaic_0001>

<llo_original>
// kernel: tpu_custom_call.1
$region0: #{tpu_custom_call.1}
  #allocation0 [shape = 'u32[]', space=smem, size = 0x4, offset = 0x4, fixed_abs, tag = 'smem constant byte address 0x4 - core index']
  #allocation1 [shape = 'u32[72,128]{1,0:T(1,128)}', space=vmem, size = 0x9000, scoped, tag = 'internal scratch']
  #allocation2 [shape = 'f32[64,48]{1,0:T(8,128)}', space=vmem, size = 0x8000, scoped, tag = 'scratch operand']
  %s0 = inlined_call_operand.vmem [shape: f32[2,3,8,4,8,4], index: 0, kind: input, shape index: {}]
  %s1 = inlined_call_operand.vmem [shape: f32[48,128], index: 1, kind: input, shape index: {}]
  %s2 = inlined_call_operand.vmem [shape: f32[8,128], index: 2, kind: input, shape index: {}]
  %s3 = inlined_call_operand.hbm [shape: f32[2,64,128], index: 3, kind: output, shape index: {}]
  %s4 = sld [smem:[#allocation0]]
  $region45: #{tpu_custom_call.1} parent=0
    _
  %s6 = ssub.s32 1, %s4
  %s7 = scalar_select 0, %s6, %s4
  $region1: #{tpu_custom_call.1} parent=0
    #allocation3 [shape = 'u8[65536]{0}', space=vmem, size = 0x10000, scoped, tag = 'output window, operand 0']
    #allocation4 [shape = 's32[2]{0}', space=sflag, size = 0x8, scoped, tag = 'scoped memory for tpu_custom_call.1']
    %8 = vsyncpa [#allocation4], 0
    %s9 = scalar_lea.sflag [#allocation4], 1
    %10 = vsyncpa %s9, 0
    loop: start=0, step=1, limit=4
    $region2: #{tpu_custom_call.1} parent=1 // loop_pre_header
      _
    $region3: #{tpu_custom_call.1} parent=1 // loop_header
      %s12 = sphi 0, %s16
      %p13 = scmp.ge.s32.totalorder %s12, 4
      %s19 = sphi 0, %s31
      %s20 = sphi 0, %s27
      %s21 = sphi 0, %s19
      %s22 = sphi 0, %s20
      %s23 = sphi 0, %s21
      %s24 = sphi 0, %s22
      %s36 = sphi 0, %s38
      %s39 = sphi 0, %s36
      %s40 = sphi 0, %s39
      %s56 = sphi 0, %s40
      %s60 = sphi 0, %s60
      %s62 = sphi 0, %s60
      %s63 = sphi 0, %s62
      %s77 = sphi 0, %s63
      %s81 = sphi 0, %s81
      %s83 = sphi 0, %s81
      %s84 = sphi 0, %s83
      %s98 = sphi 0, %s84
      %s106 = sphi 0, %s108
      %s109 = sphi 0, %s106
      %s110 = sphi 0, %s109
      %s126 = sphi 0, %s110
    $region4: #{tpu_custom_call.1} parent=1 // loop_header_branch
      %15 = sbr.rel (%p13) target = $region8
    $region5: #{tpu_custom_call.1} parent=1 // loop_body
      %s17 = ssub.s32 %s12, 1
      %s18 = ssub.s32 %s12, 2
      %s25 = sadd.s32 1, %s20
      %p26 = scmp.ge.s32.totalorder %s25, 1
      %s27 = scalar_select %p26, 0, %s25
      %s28 = sadd.s32 1, %s19
      %s29 = scalar_select %p26, %s28, %s19
      %p30 = scmp.ge.s32.totalorder %s29, 2
      %s31 = scalar_select %p30, 0, %s29
      %s32 = ssub.s32 %s19, %s31
      %s33 = ssub.s32 %s20, %s27
      %s34 = sor.u32 %s32, %s33
      %p35 = scmp.eq.s32.totalorder %s34, 0
      %s37 = sadd.s32 %s36, 1
      %s38 = scalar_select %p35, %s36, %s37
      %p41 = pneg %p35
      %p42 = scmp.eq.s32.totalorder %s12, 1
      %p43 = por %p41, %p42
      %p44 = scmp.ne.s32.totalorder %s36, %s39
      %p45 = scmp.eq.s32.totalorder %s12, 0
      %p46 = por %p44, %p45
      %p47 = scmp.ne.s32.totalorder %s36, %s39
      %p48 = scmp.eq.s32.totalorder %s17, 1
      %p49 = por %p47, %p48
      %p50 = scmp.ne.s32.totalorder %s39, %s40
      %p51 = scmp.eq.s32.totalorder %s17, 0
      %p52 = por %p50, %p51
      %p53 = scmp.ne.s32.totalorder %s39, %s40
      %p54 = scmp.eq.s32.totalorder %s18, 1
      %p55 = por %p53, %p54
      %p57 = scmp.ne.s32.totalorder %s40, %s56
      %p58 = scmp.eq.s32.totalorder %s18, 0
      %p59 = por %p57, %p58
      %s61 = sadd.s32 %s60, 1
      %p64 = scmp.eq.s32.totalorder %s12, 1
      %p65 = scmp.ne.s32.totalorder %s60, %s62
      %p66 = scmp.eq.s32.totalorder %s12, 0
      %p67 = por %p65, %p66
      %p68 = scmp.ne.s32.totalorder %s60, %s62
      %p69 = scmp.eq.s32.totalorder %s17, 1
      %p70 = por %p68, %p69
      %p71 = scmp.ne.s32.totalorder %s62, %s63
      %p72 = scmp.eq.s32.totalorder %s17, 0
      %p73 = por %p71, %p72
      %p74 = scmp.ne.s32.totalorder %s62, %s63
      %p75 = scmp.eq.s32.totalorder %s18, 1
      %p76 = por %p74, %p75
      %p78 = scmp.ne.s32.totalorder %s63, %s77
      %p79 = scmp.eq.s32.totalorder %s18, 0
      %p80 = por %p78, %p79
      %s82 = sadd.s32 %s81, 1
      %p85 = scmp.eq.s32.totalorder %s12, 1
      %p86 = scmp.ne.s32.totalorder %s81, %s83
      %p87 = scmp.eq.s32.totalorder %s12, 0
      %p88 = por %p86, %p87
      %p89 = scmp.ne.s32.totalorder %s81, %s83
      %p90 = scmp.eq.s32.totalorder %s17, 1
      %p91 = por %p89, %p90
      %p92 = scmp.ne.s32.totalorder %s83, %s84
      %p93 = scmp.eq.s32.totalorder %s17, 0
      %p94 = por %p92, %p93
      %p95 = scmp.ne.s32.totalorder %s83, %s84
      %p96 = scmp.eq.s32.totalorder %s18, 1
      %p97 = por %p95, %p96
      %p99 = scmp.ne.s32.totalorder %s84, %s98
      %p100 = scmp.eq.s32.totalorder %s18, 0
      %p101 = por %p99, %p100
      %s102 = ssub.s32 %s19, %s31
      %s103 = ssub.s32 %s20, %s27
      %s104 = sor.u32 %s102, %s103
      %p105 = scmp.eq.s32.totalorder %s104, 0
      %s107 = sadd.s32 %s106, 1
      %s108 = scalar_select %p105, %s106, %s107
      %p111 = pneg %p105
      %p112 = scmp.eq.s32.totalorder %s12, 1
      %p113 = por %p111, %p112
      %p114 = scmp.ne.s32.totalorder %s106, %s109
      %p115 = scmp.eq.s32.totalorder %s12, 0
      %p116 = por %p114, %p115
      %p117 = scmp.ne.s32.totalorder %s106, %s109
      %p118 = scmp.eq.s32.totalorder %s17, 1
      %p119 = por %p117, %p118
      %p120 = scmp.ne.s32.totalorder %s109, %s110
      %p121 = scmp.eq.s32.totalorder %s17, 0
      %p122 = por %p120, %p121
      %p123 = scmp.ne.s32.totalorder %s109, %s110
      %p124 = scmp.eq.s32.totalorder %s18, 1
      %p125 = por %p123, %p124
      %p127 = scmp.ne.s32.totalorder %s110, %s126
      %p128 = scmp.eq.s32.totalorder %s18, 0
      %p129 = por %p127, %p128
      %p130 = scmp.le.s32.totalorder 1, %s12
      %p131 = scmp.lt.s32.totalorder %s12, 3
      %p132 = pnand %p130, %p131
      %p133 = pneg %p132
      // Predicated region
      $region9: #{tpu_custom_call.1} parent=5 // pred_check
        _
      $region10: #{tpu_custom_call.1} parent=5 // pred_check_branch
        %135 = sbr.rel (%p132) target = $region12
      $region11: #{tpu_custom_call.1} parent=5 // pred_region
        %s136 = ssub.s32 %s12, 1
        // Predicated region
        $region13: #{tpu_custom_call.1} parent=11 // pred_check
          %p137 = pneg %p73
        $region14: #{tpu_custom_call.1} parent=11 // pred_check_branch
          %139 = sbr.rel (%p137) target = $region16
        $region15: #{tpu_custom_call.1} parent=11 // pred_region
          _
        $region16: #{tpu_custom_call.1} parent=11 // pred_fallthru
          _
        // Predicated region
        $region17: #{tpu_custom_call.1} parent=11 // pred_check
          %p140 = pneg %p94
        $region18: #{tpu_custom_call.1} parent=11 // pred_check_branch
          %142 = sbr.rel (%p140) target = $region20
        $region19: #{tpu_custom_call.1} parent=11 // pred_region
          _
        $region20: #{tpu_custom_call.1} parent=11 // pred_fallthru
          _
      $region12: #{tpu_custom_call.1} parent=5 // pred_fallthru
        _
      %p143 = scmp.lt.s32.totalorder %s12, 2
      // Predicated region
      $region21: #{tpu_custom_call.1} parent=5 // pred_check
        %p144 = pneg %p143
      $region22: #{tpu_custom_call.1} parent=5 // pred_check_branch
        %146 = sbr.rel (%p144) target = $region24
      $region23: #{tpu_custom_call.1} parent=5 // pred_region
        // Predicated region
        $region25: #{tpu_custom_call.1} parent=23 // pred_check
          %p147 = pneg %p46
        $region26: #{tpu_custom_call.1} parent=23 // pred_check_branch
          %149 = sbr.rel (%p147) target = $region28
        $region27: #{tpu_custom_call.1} parent=23 // pred_region
          %s150 = smul.u32 8, %s20
          %p151 = scmp.lt.s32.totalorder %s19, 1
          %s152 = scalar_select %p151, %s19, 1
          %p153 = scmp.lt.s32.totalorder %s150, 7
          %s154 = scalar_select %p153, %s150, 7
          %s155 = smul.addr %s154, 4
          %s156 = smul.addr %s152, 96
          %s157 = sadd.s32 %s155, %s156
          %s158 = smul.addr %s157, 8
          %s159 = scalar_lea.vmem %s0, %s158
          %s160 = smul.u32 8, %s20
        $region28: #{tpu_custom_call.1} parent=23 // pred_fallthru
          _
      $region24: #{tpu_custom_call.1} parent=5 // pred_fallthru
        _
      %p161 = scmp.le.s32.totalorder 1, %s12
      %p162 = scmp.lt.s32.totalorder %s12, 3
      %p163 = pnand %p161, %p162
      %p164 = pneg %p163
      // Predicated region
      $region29: #{tpu_custom_call.1} parent=5 // pred_check
        _
      $region30: #{tpu_custom_call.1} parent=5 // pred_check_branch
        %166 = sbr.rel (%p163) target = $region32
      $region31: #{tpu_custom_call.1} parent=5 // pred_region
        %s167 = ssub.s32 %s12, 1
        %s168 = smul.u32 8, %s22
        %p169 = scmp.lt.s32.totalorder %s21, 1
        %s170 = scalar_select %p169, %s21, 1
        %p171 = scmp.lt.s32.totalorder %s168, 7
        %s172 = scalar_select %p171, %s168, 7
        %s173 = smul.addr %s172, 4
        %s174 = smul.addr %s170, 96
        %s175 = sadd.s32 %s173, %s174
        %s176 = smul.addr %s175, 8
        %s177 = scalar_lea.vmem %s0, %s176
        %p178 = pneg %p52
        %p179 = pneg %p49
        %p180 = pneg %p73
        %p181 = pneg %p70
        %p182 = pneg %p94
        %p183 = pneg %p91
        %p184 = pneg %p122
        %p185 = pneg %p119
        %s186 = sand.u32 %s109, 1
        %s187 = scalar_lea.sflag [#allocation4], %s186
        %s188 = sand.u32 %s109, 1
        %s189 = smul.addr %s188, 64
        %s190 = scalar_lea.vmem [#allocation3], %s189
        %s191 = smul.u32 8, %s22
        %p192 = scmp.lt.s32.totalorder %s21, 1
        %s193 = scalar_select %p192, %s21, 1
        %p194 = scmp.lt.s32.totalorder %s191, 7
        %s195 = scalar_select %p194, %s191, 7
        %s196 = smul.addr %s195, 4
        %s197 = smul.addr %s193, 96
        %s198 = sadd.s32 %s196, %s197
        %s199 = smul.addr %s198, 8
        %s200 = scalar_lea.vmem %s0, %s199
        %s201 = smul.u32 8, %s22
        %s202 = smul.u32 8, %s22
        %v203 = vld [vmem:[%s200] sm:$0xff]
        %vm204 = vcmask 31744
        %205 = vst.msk [vmem:[#allocation2] sm:$0xff] %vm204, %v203
        %s206 = scalar_lea.vmem %s200, 8
        %v207 = vld [vmem:[%s206] sm:$0xff]
        %209 = vrot.lane.b32.xlu0 %v207, 4
        %v210 = vpop.permute.xlu0 %209
        %vm212 = vcmask 64544
        %213 = vst.msk [vmem:[#allocation2] sm:$0xff] %vm212, %v210
        %s214 = scalar_lea.vmem %s200, 16
        %v215 = vld [vmem:[%s214] sm:$0xff]
        %217 = vrot.lane.b32.xlu0 %v215, 8
        %v218 = vpop.permute.xlu0 %217
        %vm220 = vcmask 97344
        %221 = vst.msk [vmem:[#allocation2] sm:$0xff] %vm220, %v218
        %s222 = scalar_lea.vmem %s200, 24
        %v223 = vld [vmem:[%s222] sm:$0xff]
        %225 = vrot.lane.b32.xlu0 %v223, 12
        %v226 = vpop.permute.xlu0 %225
        %vm228 = vcmask 130144
        %229 = vst.msk [vmem:[#allocation2] sm:$0xff] %vm228, %v226
        %s230 = scalar_lea.vmem %s200, 256
        %v231 = vld [vmem:[%s230] sm:$0xff]
        %233 = vrot.lane.b32.xlu0 %v231, 16
        %v234 = vpop.permute.xlu0 %233
        %vm236 = vcmask 162944
        %237 = vst.msk [vmem:[#allocation2] sm:$0xff] %vm236, %v234
        %s238 = scalar_lea.vmem %s200, 264
        %v239 = vld [vmem:[%s238] sm:$0xff]
        %241 = vrot.lane.b32.xlu0 %v239, 20
        %v242 = vpop.permute.xlu0 %241
        %vm244 = vcmask 195744
        %245 = vst.msk [vmem:[#allocation2] sm:$0xff] %vm244, %v242
        %s246 = scalar_lea.vmem %s200, 272
        %v247 = vld [vmem:[%s246] sm:$0xff]
        %249 = vrot.lane.b32.xlu0 %v247, 24
        %v250 = vpop.permute.xlu0 %249
        %vm252 = vcmask 228544
        %253 = vst.msk [vmem:[#allocation2] sm:$0xff] %vm252, %v250
        %s254 = scalar_lea.vmem %s200, 280
        %v255 = vld [vmem:[%s254] sm:$0xff]
        %257 = vrot.lane.b32.xlu0 %v255, 28
        %v258 = vpop.permute.xlu0 %257
        %vm260 = vcmask 261344
        %261 = vst.msk [vmem:[#allocation2] sm:$0xff] %vm260, %v258
        %s262 = scalar_lea.vmem %s200, 512
        %v263 = vld [vmem:[%s262] sm:$0xff]
        %265 = vrot.lane.b32.xlu0 %v263, 32
        %v266 = vpop.permute.xlu0 %265
        %vm268 = vcmask 294144
        %269 = vst.msk [vmem:[#allocation2] sm:$0xff] %vm268, %v266
        %s270 = scalar_lea.vmem %s200, 520
        %v271 = vld [vmem:[%s270] sm:$0xff]
        %273 = vrot.lane.b32.xlu0 %v271, 36
        %v274 = vpop.permute.xlu0 %273
        %vm276 = vcmask 326944
        %277 = vst.msk [vmem:[#allocation2] sm:$0xff] %vm276, %v274
        %s278 = scalar_lea.vmem %s200, 528
        %v279 = vld [vmem:[%s278] sm:$0xff]
        %281 = vrot.lane.b32.xlu0 %v279, 40
        %v282 = vpop.permute.xlu0 %281
        %vm284 = vcmask 359744
        %285 = vst.msk [vmem:[#allocation2] sm:$0xff] %vm284, %v282
        %s286 = scalar_lea.vmem %s200, 536
        %v287 = vld [vmem:[%s286] sm:$0xff]
        %289 = vrot.lane.b32.xlu0 %v287, 44
        %v290 = vpop.permute.xlu0 %289
        %vm292 = vcmask 392544
        %293 = vst.msk [vmem:[#allocation2] sm:$0xff] %vm292, %v290
        %s294 = scalar_lea.vmem %s200, 32
        %v295 = vld [vmem:[%s294] sm:$0xff]
        %296 = vst.msk [vmem:[#allocation2 + $0x8] sm:$0xff] %vm204, %v295
        %s297 = scalar_lea.vmem %s200, 40
        %v298 = vld [vmem:[%s297] sm:$0xff]
        %300 = vrot.lane.b32.xlu0 %v298, 4
        %v301 = vpop.permute.xlu0 %300
        %303 = vst.msk [vmem:[#allocation2 + $0x8] sm:$0xff] %vm212, %v301
        %s304 = scalar_lea.vmem %s200, 48
        %v305 = vld [vmem:[%s304] sm:$0xff]
        %307 = vrot.lane.b32.xlu0 %v305, 8
        %v308 = vpop.permute.xlu0 %307
        %310 = vst.msk [vmem:[#allocation2 + $0x8] sm:$0xff] %vm220, %v308
        %s311 = scalar_lea.vmem %s200, 56
        %v312 = vld [vmem:[%s311] sm:$0xff]
        %314 = vrot.lane.b32.xlu0 %v312, 12
        %v315 = vpop.permute.xlu0 %314
        %317 = vst.msk [vmem:[#allocation2 + $0x8] sm:$0xff] %vm228, %v315
        %s318 = scalar_lea.vmem %s200, 288
        %v319 = vld [vmem:[%s318] sm:$0xff]
        %321 = vrot.lane.b32.xlu0 %v319, 16
        %v322 = vpop.permute.xlu0 %321
        %324 = vst.msk [vmem:[#allocation2 + $0x8] sm:$0xff] %vm236, %v322
        %s325 = scalar_lea.vmem %s200, 296
        %v326 = vld [vmem:[%s325] sm:$0xff]
        %328 = vrot.lane.b32.xlu0 %v326, 20
        %v329 = vpop.permute.xlu0 %328
        %331 = vst.msk [vmem:[#allocation2 + $0x8] sm:$0xff] %vm244, %v329
        %s332 = scalar_lea.vmem %s200, 304
        %v333 = vld [vmem:[%s332] sm:$0xff]
        %335 = vrot.lane.b32.xlu0 %v333, 24
        %v336 = vpop.permute.xlu0 %335
        %338 = vst.msk [vmem:[#allocation2 + $0x8] sm:$0xff] %vm252, %v336
        %s339 = scalar_lea.vmem %s200, 312
        %v340 = vld [vmem:[%s339] sm:$0xff]
        %342 = vrot.lane.b32.xlu0 %v340, 28
        %v343 = vpop.permute.xlu0 %342
        %345 = vst.msk [vmem:[#allocation2 + $0x8] sm:$0xff] %vm260, %v343
        %s346 = scalar_lea.vmem %s200, 544
        %v347 = vld [vmem:[%s346] sm:$0xff]
        %349 = vrot.lane.b32.xlu0 %v347, 32
        %v350 = vpop.permute.xlu0 %349
        %352 = vst.msk [vmem:[#allocation2 + $0x8] sm:$0xff] %vm268, %v350
        %s353 = scalar_lea.vmem %s200, 552
        %v354 = vld [vmem:[%s353] sm:$0xff]
        %356 = vrot.lane.b32.xlu0 %v354, 36
        %v357 = vpop.permute.xlu0 %356
        %359 = vst.msk [vmem:[#allocation2 + $0x8] sm:$0xff] %vm276, %v357
        %s360 = scalar_lea.vmem %s200, 560
        %v361 = vld [vmem:[%s360] sm:$0xff]
        %363 = vrot.lane.b32.xlu0 %v361, 40
        %v364 = vpop.permute.xlu0 %363
        %366 = vst.msk [vmem:[#allocation2 + $0x8] sm:$0xff] %vm284, %v364
        %s367 = scalar_lea.vmem %s200, 568
        %v368 = vld [vmem:[%s367] sm:$0xff]
        %370 = vrot.lane.b32.xlu0 %v368, 44
        %v371 = vpop.permute.xlu0 %370
        %373 = vst.msk [vmem:[#allocation2 + $0x8] sm:$0xff] %vm292, %v371
        %s374 = scalar_lea.vmem %s200, 64
        %v375 = vld [vmem:[%s374] sm:$0xff]
        %376 = vst.msk [vmem:[#allocation2 + $0x10] sm:$0xff] %vm204, %v375
        %s377 = scalar_lea.vmem %s200, 72
        %v378 = vld [vmem:[%s377] sm:$0xff]
        %380 = vrot.lane.b32.xlu0 %v378, 4
        %v381 = vpop.permute.xlu0 %380
        %383 = vst.msk [vmem:[#allocation2 + $0x10] sm:$0xff] %vm212, %v381
        %s384 = scalar_lea.vmem %s200, 80
        %v385 = vld [vmem:[%s384] sm:$0xff]
        %387 = vrot.lane.b32.xlu0 %v385, 8
        %v388 = vpop.permute.xlu0 %387
        %390 = vst.msk [vmem:[#allocation2 + $0x10] sm:$0xff] %vm220, %v388
        %s391 = scalar_lea.vmem %s200, 88
        %v392 = vld [vmem:[%s391] sm:$0xff]
        %394 = vrot.lane.b32.xlu0 %v392, 12
        %v395 = vpop.permute.xlu0 %394
        %397 = vst.msk [vmem:[#allocation2 + $0x10] sm:$0xff] %vm228, %v395
        %s398 = scalar_lea.vmem %s200, 320
        %v399 = vld [vmem:[%s398] sm:$0xff]
        %401 = vrot.lane.b32.xlu0 %v399, 16
        %v402 = vpop.permute.xlu0 %401
        %404 = vst.msk [vmem:[#allocation2 + $0x10] sm:$0xff] %vm236, %v402
        %s405 = scalar_lea.vmem %s200, 328
        %v406 = vld [vmem:[%s405] sm:$0xff]
        %408 = vrot.lane.b32.xlu0 %v406, 20
        %v409 = vpop.permute.xlu0 %408
        %411 = vst.msk [vmem:[#allocation2 + $0x10] sm:$0xff] %vm244, %v409
        %s412 = scalar_lea.vmem %s200, 336
        %v413 = vld [vmem:[%s412] sm:$0xff]
        %415 = vrot.lane.b32.xlu0 %v413, 24
        %v416 = vpop.permute.xlu0 %415
        %418 = vst.msk [vmem:[#allocation2 + $0x10] sm:$0xff] %vm252, %v416
        %s419 = scalar_lea.vmem %s200, 344
        %v420 = vld [vmem:[%s419] sm:$0xff]
        %422 = vrot.lane.b32.xlu0 %v420, 28
        %v423 = vpop.permute.xlu0 %422
        %425 = vst.msk [vmem:[#allocation2 + $0x10] sm:$0xff] %vm260, %v423
        %s426 = scalar_lea.vmem %s200, 576
        %v427 = vld [vmem:[%s426] sm:$0xff]
        %429 = vrot.lane.b32.xlu0 %v427, 32
        %v430 = vpop.permute.xlu0 %429
        %432 = vst.msk [vmem:[#allocation2 + $0x10] sm:$0xff] %vm268, %v430
        %s433 = scalar_lea.vmem %s200, 584
        %v434 = vld [vmem:[%s433] sm:$0xff]
        %436 = vrot.lane.b32.xlu0 %v434, 36
        %v437 = vpop.permute.xlu0 %436
        %439 = vst.msk [vmem:[#allocation2 + $0x10] sm:$0xff] %vm276, %v437
        %s440 = scalar_lea.vmem %s200, 592
        %v441 = vld [vmem:[%s440] sm:$0xff]
        %443 = vrot.lane.b32.xlu0 %v441, 40
        %v444 = vpop.permute.xlu0 %443
        %446 = vst.msk [vmem:[#allocation2 + $0x10] sm:$0xff] %vm284, %v444
        %s447 = scalar_lea.vmem %s200, 600
        %v448 = vld [vmem:[%s447] sm:$0xff]
        %450 = vrot.lane.b32.xlu0 %v448, 44
        %v451 = vpop.permute.xlu0 %450
        %453 = vst.msk [vmem:[#allocation2 + $0x10] sm:$0xff] %vm292, %v451
        %s454 = scalar_lea.vmem %s200, 96
        %v455 = vld [vmem:[%s454] sm:$0xff]
        %456 = vst.msk [vmem:[#allocation2 + $0x18] sm:$0xff] %vm204, %v455
        %s457 = scalar_lea.vmem %s200, 104
        %v458 = vld [vmem:[%s457] sm:$0xff]
        %460 = vrot.lane.b32.xlu0 %v458, 4
        %v461 = vpop.permute.xlu0 %460
        %463 = vst.msk [vmem:[#allocation2 + $0x18] sm:$0xff] %vm212, %v461
        %s464 = scalar_lea.vmem %s200, 112
        %v465 = vld [vmem:[%s464] sm:$0xff]
        %467 = vrot.lane.b32.xlu0 %v465, 8
        %v468 = vpop.permute.xlu0 %467
        %470 = vst.msk [vmem:[#allocation2 + $0x18] sm:$0xff] %vm220, %v468
        %s471 = scalar_lea.vmem %s200, 120
        %v472 = vld [vmem:[%s471] sm:$0xff]
        %474 = vrot.lane.b32.xlu0 %v472, 12
        %v475 = vpop.permute.xlu0 %474
        %477 = vst.msk [vmem:[#allocation2 + $0x18] sm:$0xff] %vm228, %v475
        %s478 = scalar_lea.vmem %s200, 352
        %v479 = vld [vmem:[%s478] sm:$0xff]
        %481 = vrot.lane.b32.xlu0 %v479, 16
        %v482 = vpop.permute.xlu0 %481
        %484 = vst.msk [vmem:[#allocation2 + $0x18] sm:$0xff] %vm236, %v482
        %s485 = scalar_lea.vmem %s200, 360
        %v486 = vld [vmem:[%s485] sm:$0xff]
        %488 = vrot.lane.b32.xlu0 %v486, 20
        %v489 = vpop.permute.xlu0 %488
        %491 = vst.msk [vmem:[#allocation2 + $0x18] sm:$0xff] %vm244, %v489
        %s492 = scalar_lea.vmem %s200, 368
        %v493 = vld [vmem:[%s492] sm:$0xff]
        %495 = vrot.lane.b32.xlu0 %v493, 24
        %v496 = vpop.permute.xlu0 %495
        %498 = vst.msk [vmem:[#allocation2 + $0x18] sm:$0xff] %vm252, %v496
        %s499 = scalar_lea.vmem %s200, 376
        %v500 = vld [vmem:[%s499] sm:$0xff]
        %502 = vrot.lane.b32.xlu0 %v500, 28
        %v503 = vpop.permute.xlu0 %502
        %505 = vst.msk [vmem:[#allocation2 + $0x18] sm:$0xff] %vm260, %v503
        %s506 = scalar_lea.vmem %s200, 608
        %v507 = vld [vmem:[%s506] sm:$0xff]
        %509 = vrot.lane.b32.xlu0 %v507, 32
        %v510 = vpop.permute.xlu0 %509
        %512 = vst.msk [vmem:[#allocation2 + $0x18] sm:$0xff] %vm268, %v510
        %s513 = scalar_lea.vmem %s200, 616
        %v514 = vld [vmem:[%s513] sm:$0xff]
        %516 = vrot.lane.b32.xlu0 %v514, 36
        %v517 = vpop.permute.xlu0 %516
        %519 = vst.msk [vmem:[#allocation2 + $0x18] sm:$0xff] %vm276, %v517
        %s520 = scalar_lea.vmem %s200, 624
        %v521 = vld [vmem:[%s520] sm:$0xff]
        %523 = vrot.lane.b32.xlu0 %v521, 40
        %v524 = vpop.permute.xlu0 %523
        %526 = vst.msk [vmem:[#allocation2 + $0x18] sm:$0xff] %vm284, %v524
        %s527 = scalar_lea.vmem %s200, 632
        %v528 = vld [vmem:[%s527] sm:$0xff]
        %530 = vrot.lane.b32.xlu0 %v528, 44
        %v531 = vpop.permute.xlu0 %530
        %533 = vst.msk [vmem:[#allocation2 + $0x18] sm:$0xff] %vm292, %v531
        %s534 = scalar_lea.vmem %s200, 128
        %v535 = vld [vmem:[%s534] sm:$0xff]
        %536 = vst.msk [vmem:[#allocation2 + $0x20] sm:$0xff] %vm204, %v535
        %s537 = scalar_lea.vmem %s200, 136
        %v538 = vld [vmem:[%s537] sm:$0xff]
        %540 = vrot.lane.b32.xlu0 %v538, 4
        %v541 = vpop.permute.xlu0 %540
        %543 = vst.msk [vmem:[#allocation2 + $0x20] sm:$0xff] %vm212, %v541
        %s544 = scalar_lea.vmem %s200, 144
        %v545 = vld [vmem:[%s544] sm:$0xff]
        %547 = vrot.lane.b32.xlu0 %v545, 8
        %v548 = vpop.permute.xlu0 %547
        %550 = vst.msk [vmem:[#allocation2 + $0x20] sm:$0xff] %vm220, %v548
        %s551 = scalar_lea.vmem %s200, 152
        %v552 = vld [vmem:[%s551] sm:$0xff]
        %554 = vrot.lane.b32.xlu0 %v552, 12
        %v555 = vpop.permute.xlu0 %554
        %557 = vst.msk [vmem:[#allocation2 + $0x20] sm:$0xff] %vm228, %v555
        %s558 = scalar_lea.vmem %s200, 384
        %v559 = vld [vmem:[%s558] sm:$0xff]
        %561 = vrot.lane.b32.xlu0 %v559, 16
        %v562 = vpop.permute.xlu0 %561
        %564 = vst.msk [vmem:[#allocation2 + $0x20] sm:$0xff] %vm236, %v562
        %s565 = scalar_lea.vmem %s200, 392
        %v566 = vld [vmem:[%s565] sm:$0xff]
        %568 = vrot.lane.b32.xlu0 %v566, 20
        %v569 = vpop.permute.xlu0 %568
        %571 = vst.msk [vmem:[#allocation2 + $0x20] sm:$0xff] %vm244, %v569
        %s572 = scalar_lea.vmem %s200, 400
        %v573 = vld [vmem:[%s572] sm:$0xff]
        %575 = vrot.lane.b32.xlu0 %v573, 24
        %v576 = vpop.permute.xlu0 %575
        %578 = vst.msk [vmem:[#allocation2 + $0x20] sm:$0xff] %vm252, %v576
        %s579 = scalar_lea.vmem %s200, 408
        %v580 = vld [vmem:[%s579] sm:$0xff]
        %582 = vrot.lane.b32.xlu0 %v580, 28
        %v583 = vpop.permute.xlu0 %582
        %585 = vst.msk [vmem:[#allocation2 + $0x20] sm:$0xff] %vm260, %v583
        %s586 = scalar_lea.vmem %s200, 640
        %v587 = vld [vmem:[%s586] sm:$0xff]
        %589 = vrot.lane.b32.xlu0 %v587, 32
        %v590 = vpop.permute.xlu0 %589
        %592 = vst.msk [vmem:[#allocation2 + $0x20] sm:$0xff] %vm268, %v590
        %s593 = scalar_lea.vmem %s200, 648
        %v594 = vld [vmem:[%s593] sm:$0xff]
        %596 = vrot.lane.b32.xlu0 %v594, 36
        %v597 = vpop.permute.xlu0 %596
        %599 = vst.msk [vmem:[#allocation2 + $0x20] sm:$0xff] %vm276, %v597
        %s600 = scalar_lea.vmem %s200, 656
        %v601 = vld [vmem:[%s600] sm:$0xff]
        %603 = vrot.lane.b32.xlu0 %v601, 40
        %v604 = vpop.permute.xlu0 %603
        %606 = vst.msk [vmem:[#allocation2 + $0x20] sm:$0xff] %vm284, %v604
        %s607 = scalar_lea.vmem %s200, 664
        %v608 = vld [vmem:[%s607] sm:$0xff]
        %610 = vrot.lane.b32.xlu0 %v608, 44
        %v611 = vpop.permute.xlu0 %610
        %613 = vst.msk [vmem:[#allocation2 + $0x20] sm:$0xff] %vm292, %v611
        %s614 = scalar_lea.vmem %s200, 160
        %v615 = vld [vmem:[%s614] sm:$0xff]
        %616 = vst.msk [vmem:[#allocation2 + $0x28] sm:$0xff] %vm204, %v615
        %s617 = scalar_lea.vmem %s200, 168
        %v618 = vld [vmem:[%s617] sm:$0xff]
        %620 = vrot.lane.b32.xlu0 %v618, 4
        %v621 = vpop.permute.xlu0 %620
        %623 = vst.msk [vmem:[#allocation2 + $0x28] sm:$0xff] %vm212, %v621
        %s624 = scalar_lea.vmem %s200, 176
        %v625 = vld [vmem:[%s624] sm:$0xff]
        %627 = vrot.lane.b32.xlu0 %v625, 8
        %v628 = vpop.permute.xlu0 %627
        %630 = vst.msk [vmem:[#allocation2 + $0x28] sm:$0xff] %vm220, %v628
        %s631 = scalar_lea.vmem %s200, 184
        %v632 = vld [vmem:[%s631] sm:$0xff]
        %634 = vrot.lane.b32.xlu0 %v632, 12
        %v635 = vpop.permute.xlu0 %634
        %637 = vst.msk [vmem:[#allocation2 + $0x28] sm:$0xff] %vm228, %v635
        %s638 = scalar_lea.vmem %s200, 416
        %v639 = vld [vmem:[%s638] sm:$0xff]
        %641 = vrot.lane.b32.xlu0 %v639, 16
        %v642 = vpop.permute.xlu0 %641
        %644 = vst.msk [vmem:[#allocation2 + $0x28] sm:$0xff] %vm236, %v642
        %s645 = scalar_lea.vmem %s200, 424
        %v646 = vld [vmem:[%s645] sm:$0xff]
        %648 = vrot.lane.b32.xlu0 %v646, 20
        %v649 = vpop.permute.xlu0 %648
        %651 = vst.msk [vmem:[#allocation2 + $0x28] sm:$0xff] %vm244, %v649
        %s652 = scalar_lea.vmem %s200, 432
        %v653 = vld [vmem:[%s652] sm:$0xff]
        %655 = vrot.lane.b32.xlu0 %v653, 24
        %v656 = vpop.permute.xlu0 %655
        %658 = vst.msk [vmem:[#allocation2 + $0x28] sm:$0xff] %vm252, %v656
        %s659 = scalar_lea.vmem %s200, 440
        %v660 = vld [vmem:[%s659] sm:$0xff]
        %662 = vrot.lane.b32.xlu0 %v660, 28
        %v663 = vpop.permute.xlu0 %662
        %665 = vst.msk [vmem:[#allocation2 + $0x28] sm:$0xff] %vm260, %v663
        %s666 = scalar_lea.vmem %s200, 672
        %v667 = vld [vmem:[%s666] sm:$0xff]
        %669 = vrot.lane.b32.xlu0 %v667, 32
        %v670 = vpop.permute.xlu0 %669
        %672 = vst.msk [vmem:[#allocation2 + $0x28] sm:$0xff] %vm268, %v670
        %s673 = scalar_lea.vmem %s200, 680
        %v674 = vld [vmem:[%s673] sm:$0xff]
        %676 = vrot.lane.b32.xlu0 %v674, 36
        %v677 = vpop.permute.xlu0 %676
        %679 = vst.msk [vmem:[#allocation2 + $0x28] sm:$0xff] %vm276, %v677
        %s680 = scalar_lea.vmem %s200, 688
        %v681 = vld [vmem:[%s680] sm:$0xff]
        %683 = vrot.lane.b32.xlu0 %v681, 40
        %v684 = vpop.permute.xlu0 %683
        %686 = vst.msk [vmem:[#allocation2 + $0x28] sm:$0xff] %vm284, %v684
        %s687 = scalar_lea.vmem %s200, 696
        %v688 = vld [vmem:[%s687] sm:$0xff]
        %690 = vrot.lane.b32.xlu0 %v688, 44
        %v691 = vpop.permute.xlu0 %690
        %693 = vst.msk [vmem:[#allocation2 + $0x28] sm:$0xff] %vm292, %v691
        %s694 = scalar_lea.vmem %s200, 192
        %v695 = vld [vmem:[%s694] sm:$0xff]
        %696 = vst.msk [vmem:[#allocation2 + $0x30] sm:$0xff] %vm204, %v695
        %s697 = scalar_lea.vmem %s200, 200
        %v698 = vld [vmem:[%s697] sm:$0xff]
        %700 = vrot.lane.b32.xlu0 %v698, 4
        %v701 = vpop.permute.xlu0 %700
        %703 = vst.msk [vmem:[#allocation2 + $0x30] sm:$0xff] %vm212, %v701
        %s704 = scalar_lea.vmem %s200, 208
        %v705 = vld [vmem:[%s704] sm:$0xff]
        %707 = vrot.lane.b32.xlu0 %v705, 8
        %v708 = vpop.permute.xlu0 %707
        %710 = vst.msk [vmem:[#allocation2 + $0x30] sm:$0xff] %vm220, %v708
        %s711 = scalar_lea.vmem %s200, 216
        %v712 = vld [vmem:[%s711] sm:$0xff]
        %714 = vrot.lane.b32.xlu0 %v712, 12
        %v715 = vpop.permute.xlu0 %714
        %717 = vst.msk [vmem:[#allocation2 + $0x30] sm:$0xff] %vm228, %v715
        %s718 = scalar_lea.vmem %s200, 448
        %v719 = vld [vmem:[%s718] sm:$0xff]
        %721 = vrot.lane.b32.xlu0 %v719, 16
        %v722 = vpop.permute.xlu0 %721
        %724 = vst.msk [vmem:[#allocation2 + $0x30] sm:$0xff] %vm236, %v722
        %s725 = scalar_lea.vmem %s200, 456
        %v726 = vld [vmem:[%s725] sm:$0xff]
        %728 = vrot.lane.b32.xlu0 %v726, 20
        %v729 = vpop.permute.xlu0 %728
        %731 = vst.msk [vmem:[#allocation2 + $0x30] sm:$0xff] %vm244, %v729
        %s732 = scalar_lea.vmem %s200, 464
        %v733 = vld [vmem:[%s732] sm:$0xff]
        %735 = vrot.lane.b32.xlu0 %v733, 24
        %v736 = vpop.permute.xlu0 %735
        %738 = vst.msk [vmem:[#allocation2 + $0x30] sm:$0xff] %vm252, %v736
        %s739 = scalar_lea.vmem %s200, 472
        %v740 = vld [vmem:[%s739] sm:$0xff]
        %742 = vrot.lane.b32.xlu0 %v740, 28
        %v743 = vpop.permute.xlu0 %742
        %745 = vst.msk [vmem:[#allocation2 + $0x30] sm:$0xff] %vm260, %v743
        %s746 = scalar_lea.vmem %s200, 704
        %v747 = vld [vmem:[%s746] sm:$0xff]
        %749 = vrot.lane.b32.xlu0 %v747, 32
        %v750 = vpop.permute.xlu0 %749
        %752 = vst.msk [vmem:[#allocation2 + $0x30] sm:$0xff] %vm268, %v750
        %s753 = scalar_lea.vmem %s200, 712
        %v754 = vld [vmem:[%s753] sm:$0xff]
        %756 = vrot.lane.b32.xlu0 %v754, 36
        %v757 = vpop.permute.xlu0 %756
        %759 = vst.msk [vmem:[#allocation2 + $0x30] sm:$0xff] %vm276, %v757
        %s760 = scalar_lea.vmem %s200, 720
        %v761 = vld [vmem:[%s760] sm:$0xff]
        %763 = vrot.lane.b32.xlu0 %v761, 40
        %v764 = vpop.permute.xlu0 %763
        %766 = vst.msk [vmem:[#allocation2 + $0x30] sm:$0xff] %vm284, %v764
        %s767 = scalar_lea.vmem %s200, 728
        %v768 = vld [vmem:[%s767] sm:$0xff]
        %770 = vrot.lane.b32.xlu0 %v768, 44
        %v771 = vpop.permute.xlu0 %770
        %773 = vst.msk [vmem:[#allocation2 + $0x30] sm:$0xff] %vm292, %v771
        %s774 = scalar_lea.vmem %s200, 224
        %v775 = vld [vmem:[%s774] sm:$0xff]
        %776 = vst.msk [vmem:[#allocation2 + $0x38] sm:$0xff] %vm204, %v775
        %s777 = scalar_lea.vmem %s200, 232
        %v778 = vld [vmem:[%s777] sm:$0xff]
        %780 = vrot.lane.b32.xlu0 %v778, 4
        %v781 = vpop.permute.xlu0 %780
        %783 = vst.msk [vmem:[#allocation2 + $0x38] sm:$0xff] %vm212, %v781
        %s784 = scalar_lea.vmem %s200, 240
        %v785 = vld [vmem:[%s784] sm:$0xff]
        %787 = vrot.lane.b32.xlu0 %v785, 8
        %v788 = vpop.permute.xlu0 %787
        %790 = vst.msk [vmem:[#allocation2 + $0x38] sm:$0xff] %vm220, %v788
        %s791 = scalar_lea.vmem %s200, 248
        %v792 = vld [vmem:[%s791] sm:$0xff]
        %794 = vrot.lane.b32.xlu0 %v792, 12
        %v795 = vpop.permute.xlu0 %794
        %797 = vst.msk [vmem:[#allocation2 + $0x38] sm:$0xff] %vm228, %v795
        %s798 = scalar_lea.vmem %s200, 480
        %v799 = vld [vmem:[%s798] sm:$0xff]
        %801 = vrot.lane.b32.xlu0 %v799, 16
        %v802 = vpop.permute.xlu0 %801
        %804 = vst.msk [vmem:[#allocation2 + $0x38] sm:$0xff] %vm236, %v802
        %s805 = scalar_lea.vmem %s200, 488
        %v806 = vld [vmem:[%s805] sm:$0xff]
        %808 = vrot.lane.b32.xlu0 %v806, 20
        %v809 = vpop.permute.xlu0 %808
        %811 = vst.msk [vmem:[#allocation2 + $0x38] sm:$0xff] %vm244, %v809
        %s812 = scalar_lea.vmem %s200, 496
        %v813 = vld [vmem:[%s812] sm:$0xff]
        %815 = vrot.lane.b32.xlu0 %v813, 24
        %v816 = vpop.permute.xlu0 %815
        %818 = vst.msk [vmem:[#allocation2 + $0x38] sm:$0xff] %vm252, %v816
        %s819 = scalar_lea.vmem %s200, 504
        %v820 = vld [vmem:[%s819] sm:$0xff]
        %822 = vrot.lane.b32.xlu0 %v820, 28
        %v823 = vpop.permute.xlu0 %822
        %825 = vst.msk [vmem:[#allocation2 + $0x38] sm:$0xff] %vm260, %v823
        %s826 = scalar_lea.vmem %s200, 736
        %v827 = vld [vmem:[%s826] sm:$0xff]
        %829 = vrot.lane.b32.xlu0 %v827, 32
        %v830 = vpop.permute.xlu0 %829
        %832 = vst.msk [vmem:[#allocation2 + $0x38] sm:$0xff] %vm268, %v830
        %s833 = scalar_lea.vmem %s200, 744
        %v834 = vld [vmem:[%s833] sm:$0xff]
        %836 = vrot.lane.b32.xlu0 %v834, 36
        %v837 = vpop.permute.xlu0 %836
        %839 = vst.msk [vmem:[#allocation2 + $0x38] sm:$0xff] %vm276, %v837
        %s840 = scalar_lea.vmem %s200, 752
        %v841 = vld [vmem:[%s840] sm:$0xff]
        %843 = vrot.lane.b32.xlu0 %v841, 40
        %v844 = vpop.permute.xlu0 %843
        %846 = vst.msk [vmem:[#allocation2 + $0x38] sm:$0xff] %vm284, %v844
        %s847 = scalar_lea.vmem %s200, 760
        %v848 = vld [vmem:[%s847] sm:$0xff]
        %850 = vrot.lane.b32.xlu0 %v848, 44
        %v851 = vpop.permute.xlu0 %850
        %853 = vst.msk [vmem:[#allocation2 + $0x38] sm:$0xff] %vm292, %v851
        %v854 = vld [vmem:[#allocation2] sm:$0xff]
        %v855 = vld [vmem:[#allocation2 + $0x8] sm:$0xff]
        %v856 = vld [vmem:[#allocation2 + $0x10] sm:$0xff]
        %v857 = vld [vmem:[#allocation2 + $0x18] sm:$0xff]
        %v858 = vld [vmem:[#allocation2 + $0x20] sm:$0xff]
        %v859 = vld [vmem:[#allocation2 + $0x28] sm:$0xff]
        %v860 = vld [vmem:[#allocation2 + $0x30] sm:$0xff]
        %v861 = vld [vmem:[#allocation2 + $0x38] sm:$0xff]
        %v862 = vld [vmem:[%s1] sm:$0xff]
        %v863 = vld [vmem:[%s1 + $0x8] sm:$0xff]
        %v864 = vld [vmem:[%s1 + $0x10] sm:$0xff]
        %v865 = vld [vmem:[%s1 + $0x18] sm:$0xff]
        %v866 = vld [vmem:[%s1 + $0x20] sm:$0xff]
        %v867 = vld [vmem:[%s1 + $0x28] sm:$0xff]
        %v868 = vld [vmem:[%s2] sm:$0x1]
        %v869 = vperm.slane %v868, 0
        %vm870 = vcmask 392192
        %v872 = vsel %vm870, %v854, 0
        %v875 = vsel %vm870, %v855, 0
        %v878 = vsel %vm870, %v856, 0
        %v881 = vsel %vm870, %v857, 0
        %v884 = vsel %vm870, %v858, 0
        %v887 = vsel %vm870, %v859, 0
        %v890 = vsel %vm870, %v860, 0
        %v893 = vsel %vm870, %v861, 0
        %895 = vmatpush.msra.mxu0 0.0
        %896 = vmatpush.msra.mxu0 0.0
        %897 = vmatpush.msra.mxu0 0.0
        %898 = vmatpush.msra.mxu0 0.0
        %899 = vmatpush.msra.mxu0 0.0
        %900 = vmatpush.msra.mxu0 0.0
        %901 = vmatpush.msra.mxu0 0.0
        %902 = vmatpush.msra.mxu0 0.0
        %903 = vmatpush.msra.mxu0 0.0
        %904 = vmatpush.msra.mxu0 0.0
        %905 = vmatpush.msra.mxu0 %v867
        %906 = vmatpush.msra.mxu0 %v866
        %907 = vmatpush.msra.mxu0 %v865
        %908 = vmatpush.msra.mxu0 %v864
        %909 = vmatpush.msra.mxu0 %v863
        %910 = vmatpush.msra.mxu0 %v862
        %911 = vmatmul.f32.gmra.mxu0 %v872
        %v912 = vpop.f32.mrf.mxu0
        %v913 = vadd.f32 %v869, %v912
        %914 = vmatmul.f32.gmra.mxu0 %v875
        %v915 = vpop.f32.mrf.mxu0
        %v916 = vadd.f32 %v869, %v915
        %917 = vmatmul.f32.gmra.mxu0 %v878
        %v918 = vpop.f32.mrf.mxu0
        %v919 = vadd.f32 %v869, %v918
        %920 = vmatmul.f32.gmra.mxu0 %v881
        %v921 = vpop.f32.mrf.mxu0
        %v922 = vadd.f32 %v869, %v921
        %923 = vmatmul.f32.gmra.mxu0 %v884
        %v924 = vpop.f32.mrf.mxu0
        %v925 = vadd.f32 %v869, %v924
        %926 = vmatmul.f32.gmra.mxu0 %v887
        %v927 = vpop.f32.mrf.mxu0
        %v928 = vadd.f32 %v869, %v927
        %929 = vmatmul.f32.gmra.mxu0 %v890
        %v930 = vpop.f32.mrf.mxu0
        %v931 = vadd.f32 %v869, %v930
        %932 = vmatmul.f32.gmra.mxu0 %v893
        %v933 = vpop.f32.mrf.mxu0
        %v934 = vadd.f32 %v869, %v933
        %935 = vdwg.mxu0
        %936 = vadd.xlane.f32.xlu0 %v913
        %v937 = vpop.xlane.xlu0 %936
        %938 = vadd.xlane.f32.xlu0 %v916
        %v939 = vpop.xlane.xlu0 %938
        %940 = vadd.xlane.f32.xlu0 %v919
        %v941 = vpop.xlane.xlu0 %940
        %942 = vadd.xlane.f32.xlu0 %v922
        %v943 = vpop.xlane.xlu0 %942
        %944 = vadd.xlane.f32.xlu0 %v925
        %v945 = vpop.xlane.xlu0 %944
        %946 = vadd.xlane.f32.xlu0 %v928
        %v947 = vpop.xlane.xlu0 %946
        %948 = vadd.xlane.f32.xlu0 %v931
        %v949 = vpop.xlane.xlu0 %948
        %950 = vadd.xlane.f32.xlu0 %v934
        %v951 = vpop.xlane.xlu0 %950
        %v952 = vmul.f32 %v937, 0.03125
        %v953 = vmul.f32 %v939, 0.03125
        %v954 = vmul.f32 %v941, 0.03125
        %v955 = vmul.f32 %v943, 0.03125
        %v956 = vmul.f32 %v945, 0.03125
        %v957 = vmul.f32 %v947, 0.03125
        %v958 = vmul.f32 %v949, 0.03125
        %v959 = vmul.f32 %v951, 0.03125
        %v960 = vmul.f32 %v913, %v913
        %v961 = vmul.f32 %v916, %v916
        %v962 = vmul.f32 %v919, %v919
        %v963 = vmul.f32 %v922, %v922
        %v964 = vmul.f32 %v925, %v925
        %v965 = vmul.f32 %v928, %v928
        %v966 = vmul.f32 %v931, %v931
        %v967 = vmul.f32 %v934, %v934
        %968 = vadd.xlane.f32.xlu0 %v960
        %v969 = vpop.xlane.xlu0 %968
        %970 = vadd.xlane.f32.xlu0 %v961
        %v971 = vpop.xlane.xlu0 %970
        %972 = vadd.xlane.f32.xlu0 %v962
        %v973 = vpop.xlane.xlu0 %972
        %974 = vadd.xlane.f32.xlu0 %v963
        %v975 = vpop.xlane.xlu0 %974
        %976 = vadd.xlane.f32.xlu0 %v964
        %v977 = vpop.xlane.xlu0 %976
        %978 = vadd.xlane.f32.xlu0 %v965
        %v979 = vpop.xlane.xlu0 %978
        %980 = vadd.xlane.f32.xlu0 %v966
        %v981 = vpop.xlane.xlu0 %980
        %982 = vadd.xlane.f32.xlu0 %v967
        %v983 = vpop.xlane.xlu0 %982
        %v984 = vmul.f32 %v969, 0.03125
        %v985 = vmul.f32 %v971, 0.03125
        %v986 = vmul.f32 %v973, 0.03125
        %v987 = vmul.f32 %v975, 0.03125
        %v988 = vmul.f32 %v977, 0.03125
        %v989 = vmul.f32 %v979, 0.03125
        %v990 = vmul.f32 %v981, 0.03125
        %v991 = vmul.f32 %v983, 0.03125
        %v992 = vsub.f32 %v913, %v952
        %v993 = vsub.f32 %v916, %v953
        %v994 = vsub.f32 %v919, %v954
        %v995 = vsub.f32 %v922, %v955
        %v996 = vsub.f32 %v925, %v956
        %v997 = vsub.f32 %v928, %v957
        %v998 = vsub.f32 %v931, %v958
        %v999 = vsub.f32 %v934, %v959
        %v1000 = vmul.f32 %v952, %v952
        %v1001 = vmul.f32 %v953, %v953
        %v1002 = vmul.f32 %v954, %v954
        %v1003 = vmul.f32 %v955, %v955
        %v1004 = vmul.f32 %v956, %v956
        %v1005 = vmul.f32 %v957, %v957
        %v1006 = vmul.f32 %v958, %v958
        %v1007 = vmul.f32 %v959, %v959
        %v1008 = vsub.f32 %v984, %v1000
        %v1009 = vsub.f32 %v985, %v1001
        %v1010 = vsub.f32 %v986, %v1002
        %v1011 = vsub.f32 %v987, %v1003
        %v1012 = vsub.f32 %v988, %v1004
        %v1013 = vsub.f32 %v989, %v1005
        %v1014 = vsub.f32 %v990, %v1006
        %v1015 = vsub.f32 %v991, %v1007
        %v1016 = vadd.f32 %v1008, 1e-05
        %v1017 = vadd.f32 %v1009, 1e-05
        %v1018 = vadd.f32 %v1010, 1e-05
        %v1019 = vadd.f32 %v1011, 1e-05
        %v1020 = vadd.f32 %v1012, 1e-05
        %v1021 = vadd.f32 %v1013, 1e-05
        %v1022 = vadd.f32 %v1014, 1e-05
        %v1023 = vadd.f32 %v1015, 1e-05
        %v1024 = vrsqrt.pop %v1016
        %v1025 = vmul.f32 %v1024, %v1016
        %v1026 = vmul.f32 %v1025, %v1024
        %v1027 = vmul.f32 0.5, %v1026
        %v1028 = vsub.f32 1.5, %v1027
        %v1029 = vmul.f32 %v1024, %v1028
        %vm1030 = vweird.f32 %v1016
        %vm1031 = vweird.f32 %v1024
        %vm1032 = vmor %vm1030, %vm1031
        %v1033 = vsel %vm1032, %v1024, %v1029
        %v1034 = vrsqrt.pop %v1017
        %v1035 = vmul.f32 %v1034, %v1017
        %v1036 = vmul.f32 %v1035, %v1034
        %v1037 = vmul.f32 0.5, %v1036
        %v1038 = vsub.f32 1.5, %v1037
        %v1039 = vmul.f32 %v1034, %v1038
        %vm1040 = vweird.f32 %v1017
        %vm1041 = vweird.f32 %v1034
        %vm1042 = vmor %vm1040, %vm1041
        %v1043 = vsel %vm1042, %v1034, %v1039
        %v1044 = vrsqrt.pop %v1018
        %v1045 = vmul.f32 %v1044, %v1018
        %v1046 = vmul.f32 %v1045, %v1044
        %v1047 = vmul.f32 0.5, %v1046
        %v1048 = vsub.f32 1.5, %v1047
        %v1049 = vmul.f32 %v1044, %v1048
        %vm1050 = vweird.f32 %v1018
        %vm1051 = vweird.f32 %v1044
        %vm1052 = vmor %vm1050, %vm1051
        %v1053 = vsel %vm1052, %v1044, %v1049
        %v1054 = vrsqrt.pop %v1019
        %v1055 = vmul.f32 %v1054, %v1019
        %v1056 = vmul.f32 %v1055, %v1054
        %v1057 = vmul.f32 0.5, %v1056
        %v1058 = vsub.f32 1.5, %v1057
        %v1059 = vmul.f32 %v1054, %v1058
        %vm1060 = vweird.f32 %v1019
        %vm1061 = vweird.f32 %v1054
        %vm1062 = vmor %vm1060, %vm1061
        %v1063 = vsel %vm1062, %v1054, %v1059
        %v1064 = vrsqrt.pop %v1020
        %v1065 = vmul.f32 %v1064, %v1020
        %v1066 = vmul.f32 %v1065, %v1064
        %v1067 = vmul.f32 0.5, %v1066
        %v1068 = vsub.f32 1.5, %v1067
        %v1069 = vmul.f32 %v1064, %v1068
        %vm1070 = vweird.f32 %v1020
        %vm1071 = vweird.f32 %v1064
        %vm1072 = vmor %vm1070, %vm1071
        %v1073 = vsel %vm1072, %v1064, %v1069
        %v1074 = vrsqrt.pop %v1021
        %v1075 = vmul.f32 %v1074, %v1021
        %v1076 = vmul.f32 %v1075, %v1074
        %v1077 = vmul.f32 0.5, %v1076
        %v1078 = vsub.f32 1.5, %v1077
        %v1079 = vmul.f32 %v1074, %v1078
        %vm1080 = vweird.f32 %v1021
        %vm1081 = vweird.f32 %v1074
        %vm1082 = vmor %vm1080, %vm1081
        %v1083 = vsel %vm1082, %v1074, %v1079
        %v1084 = vrsqrt.pop %v1022
        %v1085 = vmul.f32 %v1084, %v1022
        %v1086 = vmul.f32 %v1085, %v1084
        %v1087 = vmul.f32 0.5, %v1086
        %v1088 = vsub.f32 1.5, %v1087
        %v1089 = vmul.f32 %v1084, %v1088
        %vm1090 = vweird.f32 %v1022
        %vm1091 = vweird.f32 %v1084
        %vm1092 = vmor %vm1090, %vm1091
        %v1093 = vsel %vm1092, %v1084, %v1089
        %v1094 = vrsqrt.pop %v1023
        %v1095 = vmul.f32 %v1094, %v1023
        %v1096 = vmul.f32 %v1095, %v1094
        %v1097 = vmul.f32 0.5, %v1096
        %v1098 = vsub.f32 1.5, %v1097
        %v1099 = vmul.f32 %v1094, %v1098
        %vm1100 = vweird.f32 %v1023
        %vm1101 = vweird.f32 %v1094
        %vm1102 = vmor %vm1100, %vm1101
        %v1103 = vsel %vm1102, %v1094, %v1099
        %v1104 = vmul.f32 %v992, %v1033
        %v1105 = vmul.f32 %v993, %v1043
        %v1106 = vmul.f32 %v994, %v1053
        %v1107 = vmul.f32 %v995, %v1063
        %v1108 = vmul.f32 %v996, %v1073
        %v1109 = vmul.f32 %v997, %v1083
        %v1110 = vmul.f32 %v998, %v1093
        %v1111 = vmul.f32 %v999, %v1103
        %v1112 = vld [vmem:[%s2 + $0x1] sm:$0x1]
        %v1113 = vperm.slane %v1112, 0
        %v1114 = vmul.f32 %v1104, %v1113
        %v1115 = vmul.f32 %v1105, %v1113
        %v1116 = vmul.f32 %v1106, %v1113
        %v1117 = vmul.f32 %v1107, %v1113
        %v1118 = vmul.f32 %v1108, %v1113
        %v1119 = vmul.f32 %v1109, %v1113
        %v1120 = vmul.f32 %v1110, %v1113
        %v1121 = vmul.f32 %v1111, %v1113
        %v1122 = vld [vmem:[%s2 + $0x2] sm:$0x1]
        %v1123 = vperm.slane %v1122, 0
        %v1124 = vadd.f32 %v1114, %v1123
        %v1125 = vadd.f32 %v1115, %v1123
        %v1126 = vadd.f32 %v1116, %v1123
        %v1127 = vadd.f32 %v1117, %v1123
        %v1128 = vadd.f32 %v1118, %v1123
        %v1129 = vadd.f32 %v1119, %v1123
        %v1130 = vadd.f32 %v1120, %v1123
        %v1131 = vadd.f32 %v1121, %v1123
        %1132 = vst [vmem:[%s190] sm:$0xff] %v1124
        %1133 = vst [vmem:[%s190 + $0x8] sm:$0xff] %v1125
        %1134 = vst [vmem:[%s190 + $0x10] sm:$0xff] %v1126
        %1135 = vst [vmem:[%s190 + $0x18] sm:$0xff] %v1127
        %1136 = vst [vmem:[%s190 + $0x20] sm:$0xff] %v1128
        %1137 = vst [vmem:[%s190 + $0x28] sm:$0xff] %v1129
        %1138 = vst [vmem:[%s190 + $0x30] sm:$0xff] %v1130
        %1139 = vst [vmem:[%s190 + $0x38] sm:$0xff] %v1131
        %s1140 = sand.u32 %s109, 1
        %s1141 = scalar_lea.sflag [#allocation4], %s1140
        %s1142 = sand.u32 %s109, 1
        %s1143 = smul.addr %s1142, 64
        %s1144 = scalar_lea.vmem [#allocation3], %s1143
        // Predicated region
        $region33: #{tpu_custom_call.1} parent=31 // pred_check
          %p1145 = pneg %p119
        $region34: #{tpu_custom_call.1} parent=31 // pred_check_branch
          %1147 = sbr.rel (%p1145) target = $region36
        $region35: #{tpu_custom_call.1} parent=31 // pred_region
          %s1148 = smul.u32 8, %s22
          %1150 = vsyncadd %s1141, 0
          %s1151 = smul.addr %s21, 8
          %s1152 = sadd.s32 %s1148, %s1151
          %s1153 = smul.addr %s1152, 8
          %s1154 = scalar_lea.hbm %s3, %s1153
          %s1155 = sshll.u32 %s1144, 4
          %s1156 = int_to_ptr.vmem [resolvable:$true] %s1155
          %s1157 = sshll.u32 %s1154, 4
          %s1158 = int_to_ptr.hbm [resolvable:$true] %s1157
          %1163 = dma.vmem_to_hbm [thread:$0]  %s1156, 1024, %s1158, %s1141, 128, 128, 8
        $region36: #{tpu_custom_call.1} parent=31 // pred_fallthru
          _
      $region32: #{tpu_custom_call.1} parent=5 // pred_fallthru
        _
      %p1164 = scmp.le.s32.totalorder 2, %s12
      // Predicated region
      $region37: #{tpu_custom_call.1} parent=5 // pred_check
        %p1165 = pneg %p1164
      $region38: #{tpu_custom_call.1} parent=5 // pred_check_branch
        %1167 = sbr.rel (%p1165) target = $region40
      $region39: #{tpu_custom_call.1} parent=5 // pred_region
        %s1168 = ssub.s32 %s12, 2
        // Predicated region
        $region41: #{tpu_custom_call.1} parent=39 // pred_check
          %p1169 = pneg %p125
        $region42: #{tpu_custom_call.1} parent=39 // pred_check_branch
          %1171 = sbr.rel (%p1169) target = $region44
        $region43: #{tpu_custom_call.1} parent=39 // pred_region
          %s1172 = sand.u32 %s110, 1
          %s1173 = scalar_lea.sflag [#allocation4], %s1172
          %s1174 = sand.u32 %s110, 1
          %s1175 = smul.addr %s1174, 64
          %s1176 = scalar_lea.vmem [#allocation3], %s1175
          %1178 = dma.done %s1173, 1024
        $region44: #{tpu_custom_call.1} parent=39 // pred_fallthru
          _
      $region40: #{tpu_custom_call.1} parent=5 // pred_fallthru
        _
    $region6: #{tpu_custom_call.1} parent=1 // loop_footer
      %s16 = sadd.s32 1, %s12
    $region7: #{tpu_custom_call.1} parent=1 // loop_footer_branch
      %11 = sbr.rel target = $region3
    $region8: #{tpu_custom_call.1} parent=1 // loop_exit
      _
    %1179 = vsyncpa [#allocation4], 1
    %s1180 = scalar_lea.sflag [#allocation4], 1
    %1181 = vsyncpa %s1180, 1

</llo_original>
